<compile_context>
chip_gen: v6e
topology: v6e:2x2x1
jax: 0.10.0
libtpu: 0.0.40
codegen_flags: <defaults>
</compile_context>

<pallas_src>
import math

import jax
import jax.numpy as jnp
from jax.experimental import pallas as pl
from jax.experimental.pallas import tpu as pltpu


def _round_up(n, m):
    return ((n + m - 1) // m) * m


# ---------------------------------------------------------------------------
# Parameter packing
# ---------------------------------------------------------------------------
def prepare_layer_params(prm, k, compute_dtype=jnp.bfloat16):
    """Fuse / flatten PyTorch-layout conv params for the Pallas cell.

    Returns (w1, b1, w_oh, ch):
      w1   (3*chp, k*k*C)  rows = [W_r|pad ; W_u|pad ; W_o(x-cols, h-cols
                           zeroed)|pad], chp = round8(Ch); columns are
                           tap-major / channel-minor (matches im2col rows).
      b1   (3*chp, 1)      [b_r ; b_u ; b_o] with matching row padding (f32).
      w_oh (chp, round8(k*k*Ch))  W_o's h-channel columns (reset-dependent).
    """
    ch = prm["b_r"].shape[0]
    c = prm["w_r"].shape[1]            # Cin + Ch
    cin = c - ch
    chp = _round_up(ch, 8)
    kch = k * k * ch
    kch_p = _round_up(kch, 8)

    def flat(w):                       # (Cout, C, kH, kW) -> (Cout, k*k*C)
        return jnp.transpose(w, (0, 2, 3, 1)).reshape(w.shape[0], k * k * c)

    def pad_rows(a):
        return jnp.pad(a, ((0, chp - a.shape[0]), (0, 0)))

    wo3 = flat(prm["w_o"]).reshape(ch, k * k, c)
    wo_x = jnp.concatenate(
        [wo3[:, :, :cin], jnp.zeros((ch, k * k, ch), wo3.dtype)], axis=2
    ).reshape(ch, k * k * c)
    wo_h = wo3[:, :, cin:].reshape(ch, kch)
    wo_h = jnp.pad(wo_h, ((0, 0), (0, kch_p - kch)))

    w1 = jnp.concatenate(
        [pad_rows(flat(prm["w_r"])), pad_rows(flat(prm["w_u"])), pad_rows(wo_x)],
        axis=0).astype(compute_dtype)
    b1 = jnp.concatenate(
        [pad_rows(prm["b_r"].reshape(-1, 1)),
         pad_rows(prm["b_u"].reshape(-1, 1)),
         pad_rows(prm["b_o"].reshape(-1, 1))], axis=0).astype(jnp.float32)
    w_oh = pad_rows(wo_h).astype(compute_dtype)
    return (w1, b1, w_oh, ch)


# ---------------------------------------------------------------------------
# The cell kernel (operates on the persistent padded-flat layout)
# ---------------------------------------------------------------------------
def convgru_cell_padded(x_flat, h_flat, prepared, k, hw, bblk, npb_pad, mask,
                        compute_dtype=jnp.bfloat16):
    """One ConvGRUCell step on padded-flat inputs.

    x_flat : (nblk, Cin, Nlane) f32, zero at halo + tail lanes.
    h_flat : (nblk, Ch,  Nlane) f32, zero at halo + tail lanes.
    mask   : (1, Nlane) f32 interior mask (1 at valid output positions).
    Returns the new hidden state in the same padded-flat layout.
    """
    assert k % 2 == 1, "ConvGRUCell uses 'same' padding (odd kernel sizes)"
    H, W = hw
    p = k // 2
    wp = W + 2 * p
    nblk, cin, nlane = x_flat.shape
    w1, b1, w_oh, ch = prepared
    c = cin + ch
    chp = _round_up(ch, 8)
    kc1 = k * k * c                    # contraction depth of the fused matmul
    kch = k * k * ch                   # contraction depth of the h-only part
    kch_p = w_oh.shape[1]              # row-padded to a multiple of 8
    marg = p * wp + p                  # max |flat tap shift|
    margl = _round_up(marg, 128) if marg else 0   # 128-aligned left margin
    srcw = margl + nlane + marg
    shifts = [(dy - p) * wp + (dx - p) for dy in range(k) for dx in range(k)]
    m1 = w1.shape[0]
    m2 = w_oh.shape[0]

    def kernel(x_ref, h_ref, w1_ref, b1_ref, woh_ref, mask_ref,
               out_ref, src, pbuf, pbuf_h):
        # Margins must hold finite zeros (halo lanes feed back through
        # reset*h).  Re-zeroed every step: scratch is per-TensorCore, so a
        # program_id==0 guard would skip the core that never runs step 0 when
        # the grid is megacore-split.  Cost: one aligned + one tiny masked
        # store per step.
        if marg:
            src[:, 0:margl] = jnp.zeros((c, margl), jnp.float32)
            src[:, margl + nlane:srcw] = jnp.zeros((c, marg), jnp.float32)

        x = x_ref[0]                                    # (Cin, Nlane) f32
        h = h_ref[0]                                    # (Ch,  Nlane) f32
        src[0:cin, margl:margl + nlane] = x             # x slab (sublanes 0..Cin)
        src[cin:c, margl:margl + nlane] = h             # h slab — no lane concat

        # im2col of cat([x, h]): k*k static lane-offset slices, tap-major rows.
        for t in range(k * k):
            s = margl + shifts[t]
            pbuf[t * c:(t + 1) * c, :] = src[:, s:s + nlane].astype(compute_dtype)

        # ONE fused MXU matmul: rows = [reset ; update ; out-gate x-part]+bias.
        g = jnp.dot(w1_ref[...], pbuf[...],
                    preferred_element_type=jnp.float32) + b1_ref[...]
        reset = jax.nn.sigmoid(g[0:ch, :])
        update = jax.nn.sigmoid(g[chp:chp + ch, :])

        # Out gate, reset-dependent h-part only (K = k*k*Ch): rebuild just the
        # reset*h rows of a small h-only patch buffer (x-part already in g).
        src[cin:c, margl:margl + nlane] = reset * h
        for t in range(k * k):
            s = margl + shifts[t]
            pbuf_h[t * ch:(t + 1) * ch, :] = (
                src[cin:c, s:s + nlane].astype(compute_dtype))
        if kch_p > kch:                                  # keep K-pad rows finite
            pbuf_h[kch:kch_p, :] = jnp.zeros((kch_p - kch, nlane), compute_dtype)

        o_h = jnp.dot(woh_ref[...], pbuf_h[...],
                      preferred_element_type=jnp.float32)
        out = jnp.tanh(g[2 * chp:2 * chp + ch, :] + o_h[0:ch, :])

        # GRU blend in f32; the mask re-zeroes halo + tail lanes so the output
        # is directly reusable as the next layer's padded-flat input.
        new_h = ((1.0 - update) * h + update * out) * mask_ref[...]
        out_ref[0] = new_h.astype(out_ref.dtype)

    # NOTE: for large Hp*Wp*C, tile the lane (N) axis around the im2col + dots
    # so pbuf stays bounded within v7x's 64 MiB VMEM (trivial at these shapes).
    return pl.pallas_call(
        kernel,
        out_shape=jax.ShapeDtypeStruct((nblk, ch, nlane), jnp.float32),
        grid=(nblk,),
        in_specs=[
            pl.BlockSpec((1, cin, nlane), lambda b: (b, 0, 0)),   # x (padded flat)
            pl.BlockSpec((1, ch, nlane), lambda b: (b, 0, 0)),    # h (padded flat)
            pl.BlockSpec((m1, kc1), lambda b: (0, 0)),            # [W_r;W_u;W_o_x]
            pl.BlockSpec((m1, 1), lambda b: (0, 0)),              # [b_r;b_u;b_o]
            pl.BlockSpec((m2, kch_p), lambda b: (0, 0)),          # W_o_h
            pl.BlockSpec((1, nlane), lambda b: (0, 0)),           # interior mask
        ],
        out_specs=pl.BlockSpec((1, ch, nlane), lambda b: (b, 0, 0)),
        scratch_shapes=[
            pltpu.VMEM((c, srcw), jnp.float32),        # margin-extended [x; h]
            pltpu.VMEM((kc1, nlane), compute_dtype),   # full im2col patches
            pltpu.VMEM((kch_p, nlane), compute_dtype), # h-only (reset*h) patches
        ],
        input_output_aliases={1: 0},                   # new_h overwrites h buffer
        compiler_params=pltpu.CompilerParams(
            dimension_semantics=("parallel",),         # megacore on v7x
            vmem_limit_bytes=32 * 1024 * 1024),
    )(x_flat, h_flat, w1, b1, w_oh, mask)


# ---------------------------------------------------------------------------
# Layout plumbing (done once per layout, not per layer)
# ---------------------------------------------------------------------------
def _choose_bblk(batch, npb_pad, target_lanes=1024):
    """Batch elements per grid step: grow matmul N toward ~target_lanes while
    keeping the grid extent >= 2 when possible (keeps both v7x TCs busy)."""
    best = 1
    for d in range(1, batch + 1):
        if batch % d:
            continue
        if d > 1 and d * npb_pad > target_lanes:
            continue
        if batch // d >= 2 or batch == 1:
            best = d
    return best


def _pad_to_flat(x_nchw, p, npb_pad, bblk):
    """NCHW -> (B//bblk, C, bblk*npb_pad) padded-flat layout (zero halo/tail)."""
    b, c, hh, ww = x_nchw.shape
    hp, wp = hh + 2 * p, ww + 2 * p
    npb = hp * wp
    xf = jnp.pad(x_nchw, ((0, 0), (0, 0), (p, p), (p, p))).reshape(b, c, npb)
    xf = jnp.pad(xf, ((0, 0), (0, 0), (0, npb_pad - npb)))
    xf = xf.reshape(b // bblk, bblk, c, npb_pad).transpose(0, 2, 1, 3)
    return xf.reshape(b // bblk, c, bblk * npb_pad)


def _flat_to_nchw(x_flat, p, hh, ww, npb_pad, bblk):
    """Inverse of _pad_to_flat (drops halo + tail lanes)."""
    nblk, c, _ = x_flat.shape
    hp, wp = hh + 2 * p, ww + 2 * p
    x = x_flat.reshape(nblk, c, bblk, npb_pad).transpose(0, 2, 1, 3)
    x = x.reshape(nblk * bblk, c, npb_pad)[:, :, :hp * wp]
    return x.reshape(nblk * bblk, c, hp, wp)[:, :, p:p + hh, p:p + ww]


def _interior_mask(hh, ww, p, npb_pad, bblk):
    hp, wp = hh + 2 * p, ww + 2 * p
    m = jnp.pad(jnp.ones((hh, ww), jnp.float32), ((p, p), (p, p))).reshape(hp * wp)
    m = jnp.pad(m, (0, npb_pad - hp * wp))
    return jnp.tile(m, bblk).reshape(1, bblk * npb_pad)


# ---------------------------------------------------------------------------
# Stacked ConvGRU forward
# ---------------------------------------------------------------------------
def convgru_forward(x_nchw, layer_params, kernel_sizes, h=None,
                    compute_dtype=jnp.bfloat16):
    """ConvGRU.forward: x NCHW, h list of NCHW hidden states (or None).
    Returns (last layer output NCHW, list of per-layer new hidden NCHW)."""
    num_layers = len(layer_params)
    if h is None:
        h = [None] * num_layers
    B, _, H, W = x_nchw.shape

    x_flat = None
    cur = None                          # (p, npb_pad, bblk) of x_flat's layout
    per_layer = []
    for i in range(num_layers):
        k = kernel_sizes[i]
        p = k // 2
        npb_pad = _round_up((H + 2 * p) * (W + 2 * p), 128)
        bblk = _choose_bblk(B, npb_pad)
        layout = (p, npb_pad, bblk)
        if layout != cur:
            # (Re)build the padded-flat layout; between same-kernel-size
            # layers the previous output is reused directly (no NCHW round trip).
            src = x_nchw if x_flat is None else _flat_to_nchw(
                x_flat, cur[0], H, W, cur[1], cur[2])
            x_flat = _pad_to_flat(src, p, npb_pad, bblk)
            cur = layout

        prepared = prepare_layer_params(layer_params[i], k, compute_dtype)
        ch = prepared[-1]
        cin = x_flat.shape[1]
        if h[i] is None:
            # Mirrors the PyTorch reference's zeros_like(input): well-formed
            # only when in_size == hidden_size.
            assert cin == ch, "hidden_state=None requires in_size == hidden_size"
            h_flat = jnp.zeros((x_flat.shape[0], ch, x_flat.shape[2]), jnp.float32)
        else:
            h_flat = _pad_to_flat(h[i], p, npb_pad, bblk)

        mask = _interior_mask(H, W, p, npb_pad, bblk)
        x_flat = convgru_cell_padded(x_flat, h_flat, prepared, k, (H, W),
                                     bblk, npb_pad, mask, compute_dtype)
        per_layer.append((x_flat, p, npb_pad, bblk))

    new_h = [_flat_to_nchw(f, pp, H, W, npp, bb) for (f, pp, npp, bb) in per_layer]
    return new_h[-1], new_h


# ---------------------------------------------------------------------------
# Init + pure-JAX reference + self-test
# ---------------------------------------------------------------------------
def init_convgru_params(key, input_size, hidden_sizes, kernel_sizes):
    """Deterministic PyTorch-style uniform(+/-1/sqrt(fan_in)) init, NCHW layout."""
    params = []
    for i, (hs, ks) in enumerate(zip(hidden_sizes, kernel_sizes)):
        in_size = input_size if i == 0 else hidden_sizes[i - 1]
        cin = in_size + hs
        bound = 1.0 / math.sqrt(cin * ks * ks)
        layer = {}
        for name in ("r", "u", "o"):
            key, k1, k2 = jax.random.split(key, 3)
            layer["w_" + name] = jax.random.uniform(
                k1, (hs, cin, ks, ks), jnp.float32, -bound, bound)
            layer["b_" + name] = jax.random.uniform(
                k2, (hs,), jnp.float32, -bound, bound)
        params.append(layer)
    return params


def convgru_ref(x_nchw, layer_params, kernel_sizes):
    """Pure-JAX reference (lax.conv) mirroring the PyTorch forward, h=None."""
    x = x_nchw
    for prm, k in zip(layer_params, kernel_sizes):
        h = jnp.zeros_like(x)

        def conv(inp, w, b):
            out = jax.lax.conv_general_dilated(
                inp, jnp.transpose(w, (2, 3, 1, 0)),
                window_strides=(1, 1), padding="SAME",
                dimension_numbers=("NCHW", "HWIO", "NCHW"))
            return out + b.reshape(1, -1, 1, 1)

        comb = jnp.concatenate([x, h], axis=1)
        reset = jax.nn.sigmoid(conv(comb, prm["w_r"], prm["b_r"]))
        update = jax.nn.sigmoid(conv(comb, prm["w_u"], prm["b_u"]))
        comb_r = jnp.concatenate([x, reset * h], axis=1)
        out = jnp.tanh(conv(comb_r, prm["w_o"], prm["b_o"]))
        x = (1.0 - update) * h + update * out
    return x


if __name__ == "__main__":
    key = jax.random.PRNGKey(0)
    kx, kp = jax.random.split(key)

    # Config consistent with the module: in_size == hidden_size per layer
    # (required by the reference cell's zero hidden-state initialization).
    B, Cin, H, W = 2, 4, 16, 16
    input_size = 4
    hidden_sizes = [4, 4]
    kernel_sizes = [3, 3]

    x = jax.random.normal(kx, (B, Cin, H, W), jnp.float32)
    params = init_convgru_params(kp, input_size, hidden_sizes, kernel_sizes)

    # Exactness check: f32 MXU operands vs. the lax.conv reference.
    fwd_f32 = jax.jit(lambda xx, pp: convgru_forward(
        xx, pp, kernel_sizes, compute_dtype=jnp.float32))
    y, h_list = fwd_f32(x, params)
    y = jax.block_until_ready(y)
    for hh in h_list:
        jax.block_until_ready(hh)

    y_ref = convgru_ref(x, params, kernel_sizes)
    assert y.shape == (B, hidden_sizes[-1], H, W)
    assert all(hh.shape == (B, hs, H, W)
               for hh, hs in zip(h_list, hidden_sizes))
    assert jnp.allclose(y, y_ref, rtol=1e-4, atol=1e-4), \
        "f32 kernel mismatch vs JAX reference"

    # Default path: bf16 MXU operands (v6e/v7x recommendation); gate math,
    # accumulation and the GRU blend remain f32.
    fwd_bf16 = jax.jit(lambda xx, pp: convgru_forward(xx, pp, kernel_sizes))
    y16, _ = fwd_bf16(x, params)
    y16 = jax.block_until_ready(y16)
    assert jnp.allclose(y16, y_ref, rtol=5e-2, atol=5e-2), \
        "bf16-operand kernel mismatch vs JAX reference"

    print("KERNEL_OK")
</pallas_src>

<mosaic_0001>
module attributes {stable_mosaic.version = 11 : i64} {
  func.func @kernel(%arg0: i32, %arg1: memref<1x4x384xf32, #tpu.memory_space<vmem>>, %arg2: memref<1x4x384xf32, #tpu.memory_space<vmem>>, %arg3: memref<24x72xf32, #tpu.memory_space<vmem>>, %arg4: memref<24x1xf32, #tpu.memory_space<vmem>>, %arg5: memref<8x40xf32, #tpu.memory_space<vmem>>, %arg6: memref<1x384xf32, #tpu.memory_space<vmem>>, %arg7: memref<1x4x384xf32, #tpu.memory_space<vmem>>, %arg8: memref<8x531xf32, #tpu.memory_space<vmem>>, %arg9: memref<72x384xf32, #tpu.memory_space<vmem>>, %arg10: memref<40x384xf32, #tpu.memory_space<vmem>>) attributes {dimension_semantics = [#tpu.dimension_semantics<parallel>], iteration_bounds = array<i64: 2>, scalar_prefetch = 0 : i64, scratch_operands = 3 : i64, tpu.core_type = #tpu.core_type<tc>, window_params = [{transform_indices = @transform_0, window_bounds = array<i64: 1, 4, 384>}, {transform_indices = @transform_1, window_bounds = array<i64: 1, 4, 384>}, {pipeline_mode = #tpu.pipeline_mode<synchronous>, transform_indices = @transform_2, window_bounds = array<i64: 24, 72>}, {pipeline_mode = #tpu.pipeline_mode<synchronous>, transform_indices = @transform_3, window_bounds = array<i64: 24, 1>}, {pipeline_mode = #tpu.pipeline_mode<synchronous>, transform_indices = @transform_4, window_bounds = array<i64: 8, 40>}, {pipeline_mode = #tpu.pipeline_mode<synchronous>, transform_indices = @transform_5, window_bounds = array<i64: 1, 384>}, {transform_indices = @transform_6, window_bounds = array<i64: 1, 4, 384>}]} {
    %cst = arith.constant 0.000000e+00 : f32
    %0 = vector.broadcast %cst : f32 to vector<8x128xf32>
    %c0 = arith.constant 0 : index
    %c0_0 = arith.constant 0 : index
    %1 = vector.load %arg8[%c0, %c0_0] : memref<8x531xf32, #tpu.memory_space<vmem>>, vector<8x128xf32>
    tpu.vector_store %arg8[%c0, %c0_0], %0 {strides = array<i32>} : memref<8x531xf32, #tpu.memory_space<vmem>>, vector<8x128xf32>,
    %cst_1 = arith.constant 0.000000e+00 : f32
    %2 = vector.broadcast %cst_1 : f32 to vector<8x19xf32>
    %c0_2 = arith.constant 0 : index
    %c512 = arith.constant 512 : index
    %3 = vector.load %arg8[%c0_2, %c512] : memref<8x531xf32, #tpu.memory_space<vmem>>, vector<8x19xf32>
    tpu.vector_store %arg8[%c0_2, %c512], %2 {strides = array<i32>} : memref<8x531xf32, #tpu.memory_space<vmem>>, vector<8x19xf32>,
    %c0_3 = arith.constant 0 : index
    %c0_4 = arith.constant 0 : index
    %c0_5 = arith.constant 0 : index
    %4 = vector.load %arg1[%c0_3, %c0_4, %c0_5] : memref<1x4x384xf32, #tpu.memory_space<vmem>>, vector<1x4x384xf32>
    %5 = vector.shape_cast %4 : vector<1x4x384xf32> to vector<4x384xf32>
    %c0_6 = arith.constant 0 : index
    %c0_7 = arith.constant 0 : index
    %c0_8 = arith.constant 0 : index
    %6 = vector.load %arg2[%c0_6, %c0_7, %c0_8] : memref<1x4x384xf32, #tpu.memory_space<vmem>>, vector<1x4x384xf32>
    %7 = vector.shape_cast %6 : vector<1x4x384xf32> to vector<4x384xf32>
    %c0_9 = arith.constant 0 : index
    %c128 = arith.constant 128 : index
    %8 = vector.load %arg8[%c0_9, %c128] : memref<8x531xf32, #tpu.memory_space<vmem>>, vector<4x384xf32>
    tpu.vector_store %arg8[%c0_9, %c128], %5 {strides = array<i32>} : memref<8x531xf32, #tpu.memory_space<vmem>>, vector<4x384xf32>,
    %c4 = arith.constant 4 : index
    %c128_10 = arith.constant 128 : index
    %9 = vector.load %arg8[%c4, %c128_10] : memref<8x531xf32, #tpu.memory_space<vmem>>, vector<4x384xf32>
    tpu.vector_store %arg8[%c4, %c128_10], %7 {strides = array<i32>} : memref<8x531xf32, #tpu.memory_space<vmem>>, vector<4x384xf32>,
    %c0_11 = arith.constant 0 : index
    %c109 = arith.constant 109 : index
    %10 = vector.load %arg8[%c0_11, %c109] : memref<8x531xf32, #tpu.memory_space<vmem>>, vector<8x384xf32>
    %c0_12 = arith.constant 0 : index
    %c0_13 = arith.constant 0 : index
    %11 = vector.load %arg9[%c0_12, %c0_13] : memref<72x384xf32, #tpu.memory_space<vmem>>, vector<8x384xf32>
    tpu.vector_store %arg9[%c0_12, %c0_13], %10 {strides = array<i32>} : memref<72x384xf32, #tpu.memory_space<vmem>>, vector<8x384xf32>,
    %c0_14 = arith.constant 0 : index
    %c110 = arith.constant 110 : index
    %12 = vector.load %arg8[%c0_14, %c110] : memref<8x531xf32, #tpu.memory_space<vmem>>, vector<8x384xf32>
    %c8 = arith.constant 8 : index
    %c0_15 = arith.constant 0 : index
    %13 = vector.load %arg9[%c8, %c0_15] : memref<72x384xf32, #tpu.memory_space<vmem>>, vector<8x384xf32>
    tpu.vector_store %arg9[%c8, %c0_15], %12 {strides = array<i32>} : memref<72x384xf32, #tpu.memory_space<vmem>>, vector<8x384xf32>,
    %c0_16 = arith.constant 0 : index
    %c111 = arith.constant 111 : index
    %14 = vector.load %arg8[%c0_16, %c111] : memref<8x531xf32, #tpu.memory_space<vmem>>, vector<8x384xf32>
    %c16 = arith.constant 16 : index
    %c0_17 = arith.constant 0 : index
    %15 = vector.load %arg9[%c16, %c0_17] : memref<72x384xf32, #tpu.memory_space<vmem>>, vector<8x384xf32>
    tpu.vector_store %arg9[%c16, %c0_17], %14 {strides = array<i32>} : memref<72x384xf32, #tpu.memory_space<vmem>>, vector<8x384xf32>,
    %c0_18 = arith.constant 0 : index
    %c127 = arith.constant 127 : index
    %16 = vector.load %arg8[%c0_18, %c127] : memref<8x531xf32, #tpu.memory_space<vmem>>, vector<8x384xf32>
    %c24 = arith.constant 24 : index
    %c0_19 = arith.constant 0 : index
    %17 = vector.load %arg9[%c24, %c0_19] : memref<72x384xf32, #tpu.memory_space<vmem>>, vector<8x384xf32>
    tpu.vector_store %arg9[%c24, %c0_19], %16 {strides = array<i32>} : memref<72x384xf32, #tpu.memory_space<vmem>>, vector<8x384xf32>,
    %c0_20 = arith.constant 0 : index
    %c128_21 = arith.constant 128 : index
    %18 = vector.load %arg8[%c0_20, %c128_21] : memref<8x531xf32, #tpu.memory_space<vmem>>, vector<8x384xf32>
    %c32 = arith.constant 32 : index
    %c0_22 = arith.constant 0 : index
    %19 = vector.load %arg9[%c32, %c0_22] : memref<72x384xf32, #tpu.memory_space<vmem>>, vector<8x384xf32>
    tpu.vector_store %arg9[%c32, %c0_22], %18 {strides = array<i32>} : memref<72x384xf32, #tpu.memory_space<vmem>>, vector<8x384xf32>,
    %c0_23 = arith.constant 0 : index
    %c129 = arith.constant 129 : index
    %20 = vector.load %arg8[%c0_23, %c129] : memref<8x531xf32, #tpu.memory_space<vmem>>, vector<8x384xf32>
    %c40 = arith.constant 40 : index
    %c0_24 = arith.constant 0 : index
    %21 = vector.load %arg9[%c40, %c0_24] : memref<72x384xf32, #tpu.memory_space<vmem>>, vector<8x384xf32>
    tpu.vector_store %arg9[%c40, %c0_24], %20 {strides = array<i32>} : memref<72x384xf32, #tpu.memory_space<vmem>>, vector<8x384xf32>,
    %c0_25 = arith.constant 0 : index
    %c145 = arith.constant 145 : index
    %22 = vector.load %arg8[%c0_25, %c145] : memref<8x531xf32, #tpu.memory_space<vmem>>, vector<8x384xf32>
    %c48 = arith.constant 48 : index
    %c0_26 = arith.constant 0 : index
    %23 = vector.load %arg9[%c48, %c0_26] : memref<72x384xf32, #tpu.memory_space<vmem>>, vector<8x384xf32>
    tpu.vector_store %arg9[%c48, %c0_26], %22 {strides = array<i32>} : memref<72x384xf32, #tpu.memory_space<vmem>>, vector<8x384xf32>,
    %c0_27 = arith.constant 0 : index
    %c146 = arith.constant 146 : index
    %24 = vector.load %arg8[%c0_27, %c146] : memref<8x531xf32, #tpu.memory_space<vmem>>, vector<8x384xf32>
    %c56 = arith.constant 56 : index
    %c0_28 = arith.constant 0 : index
    %25 = vector.load %arg9[%c56, %c0_28] : memref<72x384xf32, #tpu.memory_space<vmem>>, vector<8x384xf32>
    tpu.vector_store %arg9[%c56, %c0_28], %24 {strides = array<i32>} : memref<72x384xf32, #tpu.memory_space<vmem>>, vector<8x384xf32>,
    %c0_29 = arith.constant 0 : index
    %c147 = arith.constant 147 : index
    %26 = vector.load %arg8[%c0_29, %c147] : memref<8x531xf32, #tpu.memory_space<vmem>>, vector<8x384xf32>
    %c64 = arith.constant 64 : index
    %c0_30 = arith.constant 0 : index
    %27 = vector.load %arg9[%c64, %c0_30] : memref<72x384xf32, #tpu.memory_space<vmem>>, vector<8x384xf32>
    tpu.vector_store %arg9[%c64, %c0_30], %26 {strides = array<i32>} : memref<72x384xf32, #tpu.memory_space<vmem>>, vector<8x384xf32>,
    %c0_31 = arith.constant 0 : index
    %c0_32 = arith.constant 0 : index
    %28 = vector.load %arg3[%c0_31, %c0_32] : memref<24x72xf32, #tpu.memory_space<vmem>>, vector<24x72xf32>
    %c0_33 = arith.constant 0 : index
    %c0_34 = arith.constant 0 : index
    %29 = vector.load %arg9[%c0_33, %c0_34] : memref<72x384xf32, #tpu.memory_space<vmem>>, vector<72x384xf32>
    %cst_35 = arith.constant dense<0.000000e+00> : vector<24x384xf32>
    %30 = tpu.matmul %28, %29, %cst_35 {dimension_numbers = #tpu.dot_dimension_numbers<[1], [0], [0], [1], [0, 0, 1, 1], [], []>} : vector<24x72xf32>, vector<72x384xf32>, vector<24x384xf32> -> vector<24x384xf32>
    %c0_36 = arith.constant 0 : index
    %c0_37 = arith.constant 0 : index
    %31 = vector.load %arg4[%c0_36, %c0_37] : memref<24x1xf32, #tpu.memory_space<vmem>>, vector<24x1xf32>
    %32 = vector.broadcast %31 : vector<24x1xf32> to vector<24x384xf32>
    %33 = arith.addf %30, %32 : vector<24x384xf32>
    %34 = vector.extract_strided_slice %33 {offsets = [0, 0], sizes = [4, 384], strides = [1, 1]} : vector<24x384xf32> to vector<4x384xf32>
    %35 = arith.negf %34 : vector<4x384xf32>
    %36 = math.exp %35 : vector<4x384xf32>
    %cst_38 = arith.constant 1.000000e+00 : f32
    %37 = vector.broadcast %cst_38 : f32 to vector<4x384xf32>
    %38 = arith.addf %37, %36 : vector<4x384xf32>
    %39 = arith.divf %37, %38 : vector<4x384xf32>
    %40 = vector.extract_strided_slice %33 {offsets = [8, 0], sizes = [4, 384], strides = [1, 1]} : vector<24x384xf32> to vector<4x384xf32>
    %41 = arith.negf %40 : vector<4x384xf32>
    %42 = math.exp %41 : vector<4x384xf32>
    %cst_39 = arith.constant 1.000000e+00 : f32
    %43 = vector.broadcast %cst_39 : f32 to vector<4x384xf32>
    %44 = arith.addf %43, %42 : vector<4x384xf32>
    %45 = arith.divf %43, %44 : vector<4x384xf32>
    %46 = arith.mulf %39, %7 : vector<4x384xf32>
    %c4_40 = arith.constant 4 : index
    %c128_41 = arith.constant 128 : index
    %47 = vector.load %arg8[%c4_40, %c128_41] : memref<8x531xf32, #tpu.memory_space<vmem>>, vector<4x384xf32>
    tpu.vector_store %arg8[%c4_40, %c128_41], %46 {strides = array<i32>} : memref<8x531xf32, #tpu.memory_space<vmem>>, vector<4x384xf32>,
    %c4_42 = arith.constant 4 : index
    %c109_43 = arith.constant 109 : index
    %48 = vector.load %arg8[%c4_42, %c109_43] : memref<8x531xf32, #tpu.memory_space<vmem>>, vector<4x384xf32>
    %c0_44 = arith.constant 0 : index
    %c0_45 = arith.constant 0 : index
    %49 = vector.load %arg10[%c0_44, %c0_45] : memref<40x384xf32, #tpu.memory_space<vmem>>, vector<4x384xf32>
    tpu.vector_store %arg10[%c0_44, %c0_45], %48 {strides = array<i32>} : memref<40x384xf32, #tpu.memory_space<vmem>>, vector<4x384xf32>,
    %c4_46 = arith.constant 4 : index
    %c110_47 = arith.constant 110 : index
    %50 = vector.load %arg8[%c4_46, %c110_47] : memref<8x531xf32, #tpu.memory_space<vmem>>, vector<4x384xf32>
    %c4_48 = arith.constant 4 : index
    %c0_49 = arith.constant 0 : index
    %51 = vector.load %arg10[%c4_48, %c0_49] : memref<40x384xf32, #tpu.memory_space<vmem>>, vector<4x384xf32>
    tpu.vector_store %arg10[%c4_48, %c0_49], %50 {strides = array<i32>} : memref<40x384xf32, #tpu.memory_space<vmem>>, vector<4x384xf32>,
    %c4_50 = arith.constant 4 : index
    %c111_51 = arith.constant 111 : index
    %52 = vector.load %arg8[%c4_50, %c111_51] : memref<8x531xf32, #tpu.memory_space<vmem>>, vector<4x384xf32>
    %c8_52 = arith.constant 8 : index
    %c0_53 = arith.constant 0 : index
    %53 = vector.load %arg10[%c8_52, %c0_53] : memref<40x384xf32, #tpu.memory_space<vmem>>, vector<4x384xf32>
    tpu.vector_store %arg10[%c8_52, %c0_53], %52 {strides = array<i32>} : memref<40x384xf32, #tpu.memory_space<vmem>>, vector<4x384xf32>,
    %c4_54 = arith.constant 4 : index
    %c127_55 = arith.constant 127 : index
    %54 = vector.load %arg8[%c4_54, %c127_55] : memref<8x531xf32, #tpu.memory_space<vmem>>, vector<4x384xf32>
    %c12 = arith.constant 12 : index
    %c0_56 = arith.constant 0 : index
    %55 = vector.load %arg10[%c12, %c0_56] : memref<40x384xf32, #tpu.memory_space<vmem>>, vector<4x384xf32>
    tpu.vector_store %arg10[%c12, %c0_56], %54 {strides = array<i32>} : memref<40x384xf32, #tpu.memory_space<vmem>>, vector<4x384xf32>,
    %c4_57 = arith.constant 4 : index
    %c128_58 = arith.constant 128 : index
    %56 = vector.load %arg8[%c4_57, %c128_58] : memref<8x531xf32, #tpu.memory_space<vmem>>, vector<4x384xf32>
    %c16_59 = arith.constant 16 : index
    %c0_60 = arith.constant 0 : index
    %57 = vector.load %arg10[%c16_59, %c0_60] : memref<40x384xf32, #tpu.memory_space<vmem>>, vector<4x384xf32>
    tpu.vector_store %arg10[%c16_59, %c0_60], %56 {strides = array<i32>} : memref<40x384xf32, #tpu.memory_space<vmem>>, vector<4x384xf32>,
    %c4_61 = arith.constant 4 : index
    %c129_62 = arith.constant 129 : index
    %58 = vector.load %arg8[%c4_61, %c129_62] : memref<8x531xf32, #tpu.memory_space<vmem>>, vector<4x384xf32>
    %c20 = arith.constant 20 : index
    %c0_63 = arith.constant 0 : index
    %59 = vector.load %arg10[%c20, %c0_63] : memref<40x384xf32, #tpu.memory_space<vmem>>, vector<4x384xf32>
    tpu.vector_store %arg10[%c20, %c0_63], %58 {strides = array<i32>} : memref<40x384xf32, #tpu.memory_space<vmem>>, vector<4x384xf32>,
    %c4_64 = arith.constant 4 : index
    %c145_65 = arith.constant 145 : index
    %60 = vector.load %arg8[%c4_64, %c145_65] : memref<8x531xf32, #tpu.memory_space<vmem>>, vector<4x384xf32>
    %c24_66 = arith.constant 24 : index
    %c0_67 = arith.constant 0 : index
    %61 = vector.load %arg10[%c24_66, %c0_67] : memref<40x384xf32, #tpu.memory_space<vmem>>, vector<4x384xf32>
    tpu.vector_store %arg10[%c24_66, %c0_67], %60 {strides = array<i32>} : memref<40x384xf32, #tpu.memory_space<vmem>>, vector<4x384xf32>,
    %c4_68 = arith.constant 4 : index
    %c146_69 = arith.constant 146 : index
    %62 = vector.load %arg8[%c4_68, %c146_69] : memref<8x531xf32, #tpu.memory_space<vmem>>, vector<4x384xf32>
    %c28 = arith.constant 28 : index
    %c0_70 = arith.constant 0 : index
    %63 = vector.load %arg10[%c28, %c0_70] : memref<40x384xf32, #tpu.memory_space<vmem>>, vector<4x384xf32>
    tpu.vector_store %arg10[%c28, %c0_70], %62 {strides = array<i32>} : memref<40x384xf32, #tpu.memory_space<vmem>>, vector<4x384xf32>,
    %c4_71 = arith.constant 4 : index
    %c147_72 = arith.constant 147 : index
    %64 = vector.load %arg8[%c4_71, %c147_72] : memref<8x531xf32, #tpu.memory_space<vmem>>, vector<4x384xf32>
    %c32_73 = arith.constant 32 : index
    %c0_74 = arith.constant 0 : index
    %65 = vector.load %arg10[%c32_73, %c0_74] : memref<40x384xf32, #tpu.memory_space<vmem>>, vector<4x384xf32>
    tpu.vector_store %arg10[%c32_73, %c0_74], %64 {strides = array<i32>} : memref<40x384xf32, #tpu.memory_space<vmem>>, vector<4x384xf32>,
    %cst_75 = arith.constant 0.000000e+00 : f32
    %66 = vector.broadcast %cst_75 : f32 to vector<4x384xf32>
    %c36 = arith.constant 36 : index
    %c0_76 = arith.constant 0 : index
    %67 = vector.load %arg10[%c36, %c0_76] : memref<40x384xf32, #tpu.memory_space<vmem>>, vector<4x384xf32>
    tpu.vector_store %arg10[%c36, %c0_76], %66 {strides = array<i32>} : memref<40x384xf32, #tpu.memory_space<vmem>>, vector<4x384xf32>,
    %c0_77 = arith.constant 0 : index
    %c0_78 = arith.constant 0 : index
    %68 = vector.load %arg5[%c0_77, %c0_78] : memref<8x40xf32, #tpu.memory_space<vmem>>, vector<8x40xf32>
    %c0_79 = arith.constant 0 : index
    %c0_80 = arith.constant 0 : index
    %69 = vector.load %arg10[%c0_79, %c0_80] : memref<40x384xf32, #tpu.memory_space<vmem>>, vector<40x384xf32>
    %cst_81 = arith.constant dense<0.000000e+00> : vector<8x384xf32>
    %70 = tpu.matmul %68, %69, %cst_81 {dimension_numbers = #tpu.dot_dimension_numbers<[1], [0], [0], [1], [0, 0, 1, 1], [], []>} : vector<8x40xf32>, vector<40x384xf32>, vector<8x384xf32> -> vector<8x384xf32>
    %71 = vector.extract_strided_slice %33 {offsets = [16, 0], sizes = [4, 384], strides = [1, 1]} : vector<24x384xf32> to vector<4x384xf32>
    %72 = vector.extract_strided_slice %70 {offsets = [0, 0], sizes = [4, 384], strides = [1, 1]} : vector<8x384xf32> to vector<4x384xf32>
    %73 = arith.addf %71, %72 : vector<4x384xf32>
    %74 = math.tanh %73 : vector<4x384xf32>
    %cst_82 = arith.constant 1.000000e+00 : f32
    %75 = vector.broadcast %cst_82 : f32 to vector<4x384xf32>
    %76 = arith.subf %75, %45 : vector<4x384xf32>
    %77 = arith.mulf %76, %7 : vector<4x384xf32>
    %78 = arith.mulf %45, %74 : vector<4x384xf32>
    %79 = arith.addf %77, %78 : vector<4x384xf32>
    %c0_83 = arith.constant 0 : index
    %c0_84 = arith.constant 0 : index
    %80 = vector.load %arg6[%c0_83, %c0_84] : memref<1x384xf32, #tpu.memory_space<vmem>>, vector<1x384xf32>
    %81 = vector.broadcast %80 : vector<1x384xf32> to vector<4x384xf32>
    %82 = arith.mulf %79, %81 : vector<4x384xf32>
    %c0_85 = arith.constant 0 : index
    %c0_86 = arith.constant 0 : index
    %c0_87 = arith.constant 0 : index
    %83 = vector.load %arg7[%c0_85, %c0_86, %c0_87] : memref<1x4x384xf32, #tpu.memory_space<vmem>>, vector<1x4x384xf32>
    %84 = vector.shape_cast %83 : vector<1x4x384xf32> to vector<4x384xf32>
    %85 = vector.shape_cast %82 : vector<4x384xf32> to vector<1x4x384xf32>
    tpu.vector_store %arg7[%c0_85, %c0_86, %c0_87], %85 {strides = array<i32>} : memref<1x4x384xf32, #tpu.memory_space<vmem>>, vector<1x4x384xf32>,
    return
  }
  func.func @transform_0(%arg0: i32) -> (i32, i32, i32) {
    %c0_i32 = arith.constant 0 : i32
    %c0_i32_0 = arith.constant 0 : i32
    %c0_i32_1 = arith.constant 0 : i32
    return %arg0, %c0_i32, %c0_i32_0 : i32, i32, i32
  }
  func.func @transform_1(%arg0: i32) -> (i32, i32, i32) {
    %c0_i32 = arith.constant 0 : i32
    %c0_i32_0 = arith.constant 0 : i32
    %c0_i32_1 = arith.constant 0 : i32
    return %arg0, %c0_i32, %c0_i32_0 : i32, i32, i32
  }
  func.func @transform_2(%arg0: i32) -> (i32, i32) {
    %c0_i32 = arith.constant 0 : i32
    %c0_i32_0 = arith.constant 0 : i32
    %c0_i32_1 = arith.constant 0 : i32
    return %c0_i32, %c0_i32_0 : i32, i32
  }
  func.func @transform_3(%arg0: i32) -> (i32, i32) {
    %c0_i32 = arith.constant 0 : i32
    %c0_i32_0 = arith.constant 0 : i32
    %c0_i32_1 = arith.constant 0 : i32
    return %c0_i32, %c0_i32_0 : i32, i32
  }
  func.func @transform_4(%arg0: i32) -> (i32, i32) {
    %c0_i32 = arith.constant 0 : i32
    %c0_i32_0 = arith.constant 0 : i32
    %c0_i32_1 = arith.constant 0 : i32
    return %c0_i32, %c0_i32_0 : i32, i32
  }
  func.func @transform_5(%arg0: i32) -> (i32, i32) {
    %c0_i32 = arith.constant 0 : i32
    %c0_i32_0 = arith.constant 0 : i32
    %c0_i32_1 = arith.constant 0 : i32
    return %c0_i32, %c0_i32_0 : i32, i32
  }
  func.func @transform_6(%arg0: i32) -> (i32, i32, i32) {
    %c0_i32 = arith.constant 0 : i32
    %c0_i32_0 = arith.constant 0 : i32
    %c0_i32_1 = arith.constant 0 : i32
    return %arg0, %c0_i32, %c0_i32_0 : i32, i32, i32
  }
}

</mosaic_0001>

<llo_original>
// kernel: tile.2
$region0: #{tile.2}
  #allocation0 [shape = 's32[1]{0}', space=sflag, size = 0x4, scoped, tag = 'scoped memory for tile.2']
  %s0 = inlined_call_operand.vmem [shape: f32[384], index: 0, kind: input, shape index: {}]
  %s1 = inlined_call_operand.vmem [shape: f32[1,384], index: 1, kind: output, shape index: {}]
  // Predicated region
  $region2: #{tile.2} parent=0 // pred_check
    _
  $region3: #{tile.2} parent=0 // pred_check_branch
    %3 = sbr.rel (0) target = $region5
  $region4: #{tile.2} parent=0 // pred_region
    _
  $region5: #{tile.2} parent=0 // pred_fallthru
    _
  %v4 = vld [vmem:[%s0] ss:$0 sm:$0xff]
  %5 = vst [vmem:[%s1] sm:$0x1] %v4
  %s6 = scalar_lea.vmem %s0, 1
  %v7 = vld [vmem:[%s6] ss:$0 sm:$0xff]
  %s8 = scalar_lea.vmem %s1, 1
  %9 = vst [vmem:[%s8] sm:$0x1] %v7
  %s10 = scalar_lea.vmem %s0, 2
  %v11 = vld [vmem:[%s10] ss:$0 sm:$0xff]
  %s12 = scalar_lea.vmem %s1, 2
  %13 = vst [vmem:[%s12] sm:$0x1] %v11

// kernel: _lambda_.2
$region0: #{_lambda_.2}
  #allocation0 [shape = 'u32[]', space=smem, size = 0x4, offset = 0x4, fixed_abs, tag = 'smem constant byte address 0x4 - core index']
  #allocation1 [shape = 'u32[144,128]{1,0:T(1,128)}', space=vmem, size = 0x12000, scoped, tag = 'internal scratch']
  #allocation2 [shape = 'f32[8,531]{1,0:T(8,128)}', space=vmem, size = 0x5000, scoped, tag = 'scratch operand']
  #allocation3 [shape = 'f32[72,384]{1,0:T(8,128)}', space=vmem, size = 0x1b000, scoped, tag = 'scratch operand']
  #allocation4 [shape = 'f32[40,384]{1,0:T(8,128)}', space=vmem, size = 0xf000, scoped, tag = 'scratch operand']
  %s0 = inlined_call_operand.vmem [shape: f32[2,4,384], index: 0, kind: input, shape index: {}]
  %s1 = inlined_call_operand.vmem [shape: f32[2,4,384], index: 1, kind: input, shape index: {}, may-alias: {1,6}]
  %s2 = inlined_call_operand.vmem [shape: f32[24,72], index: 2, kind: input, shape index: {}]
  %s3 = inlined_call_operand.vmem [shape: f32[24,1], index: 3, kind: input, shape index: {}]
  %s4 = inlined_call_operand.vmem [shape: f32[8,40], index: 4, kind: input, shape index: {}]
  %s5 = inlined_call_operand.vmem [shape: f32[1,384], index: 5, kind: input, shape index: {}]
  %s6 = inlined_call_operand.vmem [shape: f32[2,4,384], index: 6, kind: output, shape index: {}, may-alias: {1,6}]
  %s7 = sld [smem:[#allocation0]]
  $region57: #{_lambda_.2} parent=0
    _
  %s9 = ssub.s32 1, %s7
  %s10 = scalar_select 0, %s9, %s7
  loop: start=0, step=1, limit=4
  $region2: #{_lambda_.2} parent=0 // loop_pre_header
    _
  $region3: #{_lambda_.2} parent=0 // loop_header
    %s12 = sphi 0, %s16
    %p13 = scmp.ge.s32.totalorder %s12, 4
    %s22 = sphi 0, %s24
    %s25 = sphi 0, %s22
    %s26 = sphi 0, %s25
    %s42 = sphi 0, %s26
    %s48 = sphi 0, %s50
    %s51 = sphi 0, %s48
    %s52 = sphi 0, %s51
    %s68 = sphi 0, %s52
    %s72 = sphi 0, %s72
    %s74 = sphi 0, %s72
    %s75 = sphi 0, %s74
    %s89 = sphi 0, %s75
    %s93 = sphi 0, %s93
    %s95 = sphi 0, %s93
    %s96 = sphi 0, %s95
    %s110 = sphi 0, %s96
    %s114 = sphi 0, %s114
    %s116 = sphi 0, %s114
    %s117 = sphi 0, %s116
    %s131 = sphi 0, %s117
    %s135 = sphi 0, %s135
    %s137 = sphi 0, %s135
    %s138 = sphi 0, %s137
    %s152 = sphi 0, %s138
    %s158 = sphi 0, %s160
    %s161 = sphi 0, %s158
    %s162 = sphi 0, %s161
    %s178 = sphi 0, %s162
  $region4: #{_lambda_.2} parent=0 // loop_header_branch
    %15 = sbr.rel (%p13) target = $region8
  $region5: #{_lambda_.2} parent=0 // loop_body
    %s17 = ssub.s32 %s12, 1
    %s18 = ssub.s32 %s12, 2
    %s19 = sadd.s32 %s12, 1
    %s20 = ssub.s32 %s12, %s19
    %p21 = scmp.eq.s32.totalorder %s20, 0
    %s23 = sadd.s32 %s22, 1
    %s24 = scalar_select %p21, %s22, %s23
    %p27 = pneg %p21
    %p28 = scmp.eq.s32.totalorder %s12, 1
    %p29 = por %p27, %p28
    %p30 = scmp.ne.s32.totalorder %s22, %s25
    %p31 = scmp.eq.s32.totalorder %s12, 0
    %p32 = por %p30, %p31
    %p33 = scmp.ne.s32.totalorder %s22, %s25
    %p34 = scmp.eq.s32.totalorder %s17, 1
    %p35 = por %p33, %p34
    %p36 = scmp.ne.s32.totalorder %s25, %s26
    %p37 = scmp.eq.s32.totalorder %s17, 0
    %p38 = por %p36, %p37
    %p39 = scmp.ne.s32.totalorder %s25, %s26
    %p40 = scmp.eq.s32.totalorder %s18, 1
    %p41 = por %p39, %p40
    %p43 = scmp.ne.s32.totalorder %s26, %s42
    %p44 = scmp.eq.s32.totalorder %s18, 0
    %p45 = por %p43, %p44
    %s46 = ssub.s32 %s12, %s19
    %p47 = scmp.eq.s32.totalorder %s46, 0
    %s49 = sadd.s32 %s48, 1
    %s50 = scalar_select %p47, %s48, %s49
    %p53 = pneg %p47
    %p54 = scmp.eq.s32.totalorder %s12, 1
    %p55 = por %p53, %p54
    %p56 = scmp.ne.s32.totalorder %s48, %s51
    %p57 = scmp.eq.s32.totalorder %s12, 0
    %p58 = por %p56, %p57
    %p59 = scmp.ne.s32.totalorder %s48, %s51
    %p60 = scmp.eq.s32.totalorder %s17, 1
    %p61 = por %p59, %p60
    %p62 = scmp.ne.s32.totalorder %s51, %s52
    %p63 = scmp.eq.s32.totalorder %s17, 0
    %p64 = por %p62, %p63
    %p65 = scmp.ne.s32.totalorder %s51, %s52
    %p66 = scmp.eq.s32.totalorder %s18, 1
    %p67 = por %p65, %p66
    %p69 = scmp.ne.s32.totalorder %s52, %s68
    %p70 = scmp.eq.s32.totalorder %s18, 0
    %p71 = por %p69, %p70
    %s73 = sadd.s32 %s72, 1
    %p76 = scmp.eq.s32.totalorder %s12, 1
    %p77 = scmp.ne.s32.totalorder %s72, %s74
    %p78 = scmp.eq.s32.totalorder %s12, 0
    %p79 = por %p77, %p78
    %p80 = scmp.ne.s32.totalorder %s72, %s74
    %p81 = scmp.eq.s32.totalorder %s17, 1
    %p82 = por %p80, %p81
    %p83 = scmp.ne.s32.totalorder %s74, %s75
    %p84 = scmp.eq.s32.totalorder %s17, 0
    %p85 = por %p83, %p84
    %p86 = scmp.ne.s32.totalorder %s74, %s75
    %p87 = scmp.eq.s32.totalorder %s18, 1
    %p88 = por %p86, %p87
    %p90 = scmp.ne.s32.totalorder %s75, %s89
    %p91 = scmp.eq.s32.totalorder %s18, 0
    %p92 = por %p90, %p91
    %s94 = sadd.s32 %s93, 1
    %p97 = scmp.eq.s32.totalorder %s12, 1
    %p98 = scmp.ne.s32.totalorder %s93, %s95
    %p99 = scmp.eq.s32.totalorder %s12, 0
    %p100 = por %p98, %p99
    %p101 = scmp.ne.s32.totalorder %s93, %s95
    %p102 = scmp.eq.s32.totalorder %s17, 1
    %p103 = por %p101, %p102
    %p104 = scmp.ne.s32.totalorder %s95, %s96
    %p105 = scmp.eq.s32.totalorder %s17, 0
    %p106 = por %p104, %p105
    %p107 = scmp.ne.s32.totalorder %s95, %s96
    %p108 = scmp.eq.s32.totalorder %s18, 1
    %p109 = por %p107, %p108
    %p111 = scmp.ne.s32.totalorder %s96, %s110
    %p112 = scmp.eq.s32.totalorder %s18, 0
    %p113 = por %p111, %p112
    %s115 = sadd.s32 %s114, 1
    %p118 = scmp.eq.s32.totalorder %s12, 1
    %p119 = scmp.ne.s32.totalorder %s114, %s116
    %p120 = scmp.eq.s32.totalorder %s12, 0
    %p121 = por %p119, %p120
    %p122 = scmp.ne.s32.totalorder %s114, %s116
    %p123 = scmp.eq.s32.totalorder %s17, 1
    %p124 = por %p122, %p123
    %p125 = scmp.ne.s32.totalorder %s116, %s117
    %p126 = scmp.eq.s32.totalorder %s17, 0
    %p127 = por %p125, %p126
    %p128 = scmp.ne.s32.totalorder %s116, %s117
    %p129 = scmp.eq.s32.totalorder %s18, 1
    %p130 = por %p128, %p129
    %p132 = scmp.ne.s32.totalorder %s117, %s131
    %p133 = scmp.eq.s32.totalorder %s18, 0
    %p134 = por %p132, %p133
    %s136 = sadd.s32 %s135, 1
    %p139 = scmp.eq.s32.totalorder %s12, 1
    %p140 = scmp.ne.s32.totalorder %s135, %s137
    %p141 = scmp.eq.s32.totalorder %s12, 0
    %p142 = por %p140, %p141
    %p143 = scmp.ne.s32.totalorder %s135, %s137
    %p144 = scmp.eq.s32.totalorder %s17, 1
    %p145 = por %p143, %p144
    %p146 = scmp.ne.s32.totalorder %s137, %s138
    %p147 = scmp.eq.s32.totalorder %s17, 0
    %p148 = por %p146, %p147
    %p149 = scmp.ne.s32.totalorder %s137, %s138
    %p150 = scmp.eq.s32.totalorder %s18, 1
    %p151 = por %p149, %p150
    %p153 = scmp.ne.s32.totalorder %s138, %s152
    %p154 = scmp.eq.s32.totalorder %s18, 0
    %p155 = por %p153, %p154
    %s156 = ssub.s32 %s12, %s19
    %p157 = scmp.eq.s32.totalorder %s156, 0
    %s159 = sadd.s32 %s158, 1
    %s160 = scalar_select %p157, %s158, %s159
    %p163 = pneg %p157
    %p164 = scmp.eq.s32.totalorder %s12, 1
    %p165 = por %p163, %p164
    %p166 = scmp.ne.s32.totalorder %s158, %s161
    %p167 = scmp.eq.s32.totalorder %s12, 0
    %p168 = por %p166, %p167
    %p169 = scmp.ne.s32.totalorder %s158, %s161
    %p170 = scmp.eq.s32.totalorder %s17, 1
    %p171 = por %p169, %p170
    %p172 = scmp.ne.s32.totalorder %s161, %s162
    %p173 = scmp.eq.s32.totalorder %s17, 0
    %p174 = por %p172, %p173
    %p175 = scmp.ne.s32.totalorder %s161, %s162
    %p176 = scmp.eq.s32.totalorder %s18, 1
    %p177 = por %p175, %p176
    %p179 = scmp.ne.s32.totalorder %s162, %s178
    %p180 = scmp.eq.s32.totalorder %s18, 0
    %p181 = por %p179, %p180
    %p182 = scmp.le.s32.totalorder 1, %s12
    %p183 = scmp.lt.s32.totalorder %s12, 3
    %p184 = pnand %p182, %p183
    %p185 = pneg %p184
    // Predicated region
    $region9: #{_lambda_.2} parent=5 // pred_check
      _
    $region10: #{_lambda_.2} parent=5 // pred_check_branch
      %187 = sbr.rel (%p184) target = $region12
    $region11: #{_lambda_.2} parent=5 // pred_region
      %s188 = ssub.s32 %s12, 1
      // Predicated region
      $region13: #{_lambda_.2} parent=11 // pred_check
        %p189 = pneg %p85
      $region14: #{_lambda_.2} parent=11 // pred_check_branch
        %191 = sbr.rel (%p189) target = $region16
      $region15: #{_lambda_.2} parent=11 // pred_region
        _
      $region16: #{_lambda_.2} parent=11 // pred_fallthru
        _
      // Predicated region
      $region17: #{_lambda_.2} parent=11 // pred_check
        %p192 = pneg %p106
      $region18: #{_lambda_.2} parent=11 // pred_check_branch
        %194 = sbr.rel (%p192) target = $region20
      $region19: #{_lambda_.2} parent=11 // pred_region
        _
      $region20: #{_lambda_.2} parent=11 // pred_fallthru
        _
      // Predicated region
      $region21: #{_lambda_.2} parent=11 // pred_check
        %p195 = pneg %p127
      $region22: #{_lambda_.2} parent=11 // pred_check_branch
        %197 = sbr.rel (%p195) target = $region24
      $region23: #{_lambda_.2} parent=11 // pred_region
        _
      $region24: #{_lambda_.2} parent=11 // pred_fallthru
        _
      // Predicated region
      $region25: #{_lambda_.2} parent=11 // pred_check
        %p198 = pneg %p148
      $region26: #{_lambda_.2} parent=11 // pred_check_branch
        %200 = sbr.rel (%p198) target = $region28
      $region27: #{_lambda_.2} parent=11 // pred_region
        _
      $region28: #{_lambda_.2} parent=11 // pred_fallthru
        _
    $region12: #{_lambda_.2} parent=5 // pred_fallthru
      _
    %p201 = scmp.lt.s32.totalorder %s12, 2
    // Predicated region
    $region29: #{_lambda_.2} parent=5 // pred_check
      %p202 = pneg %p201
    $region30: #{_lambda_.2} parent=5 // pred_check_branch
      %204 = sbr.rel (%p202) target = $region32
    $region31: #{_lambda_.2} parent=5 // pred_region
      // Predicated region
      $region33: #{_lambda_.2} parent=31 // pred_check
        %p205 = pneg %p32
      $region34: #{_lambda_.2} parent=31 // pred_check_branch
        %207 = sbr.rel (%p205) target = $region36
      $region35: #{_lambda_.2} parent=31 // pred_region
        %p208 = scmp.lt.s32.totalorder %s12, 1
        %s209 = scalar_select %p208, %s12, 1
        %s210 = smul.addr %s209, 3
        %s211 = smul.addr %s210, 4
        %s212 = scalar_lea.vmem %s0, %s211
      $region36: #{_lambda_.2} parent=31 // pred_fallthru
        _
      // Predicated region
      $region37: #{_lambda_.2} parent=31 // pred_check
        %p213 = pneg %p58
      $region38: #{_lambda_.2} parent=31 // pred_check_branch
        %215 = sbr.rel (%p213) target = $region40
      $region39: #{_lambda_.2} parent=31 // pred_region
        %p216 = scmp.lt.s32.totalorder %s12, 1
        %s217 = scalar_select %p216, %s12, 1
        %s218 = smul.addr %s217, 3
        %s219 = smul.addr %s218, 4
        %s220 = scalar_lea.vmem %s1, %s219
      $region40: #{_lambda_.2} parent=31 // pred_fallthru
        _
    $region32: #{_lambda_.2} parent=5 // pred_fallthru
      _
    %p221 = scmp.le.s32.totalorder 1, %s12
    %p222 = scmp.lt.s32.totalorder %s12, 3
    %p223 = pnand %p221, %p222
    %p224 = pneg %p223
    // Predicated region
    $region41: #{_lambda_.2} parent=5 // pred_check
      _
    $region42: #{_lambda_.2} parent=5 // pred_check_branch
      %226 = sbr.rel (%p223) target = $region44
    $region43: #{_lambda_.2} parent=5 // pred_region
      %s227 = ssub.s32 %s12, 1
      %p228 = scmp.lt.s32.totalorder %s17, 1
      %s229 = scalar_select %p228, %s17, 1
      %s230 = smul.addr %s229, 3
      %s231 = smul.addr %s230, 4
      %s232 = scalar_lea.vmem %s0, %s231
      %p233 = pneg %p38
      %p234 = pneg %p35
      %p235 = scmp.lt.s32.totalorder %s17, 1
      %s236 = scalar_select %p235, %s17, 1
      %s237 = smul.addr %s236, 3
      %s238 = smul.addr %s237, 4
      %s239 = scalar_lea.vmem %s1, %s238
      %p240 = pneg %p64
      %p241 = pneg %p61
      %p242 = pneg %p85
      %p243 = pneg %p82
      %p244 = pneg %p106
      %p245 = pneg %p103
      %p246 = pneg %p127
      %p247 = pneg %p124
      %p248 = pneg %p148
      %p249 = pneg %p145
      %p250 = pneg %p174
      %p251 = pneg %p171
      %p252 = scmp.lt.s32.totalorder %s17, 1
      %s253 = scalar_select %p252, %s17, 1
      %s254 = smul.addr %s253, 3
      %s255 = smul.addr %s254, 4
      %s256 = scalar_lea.vmem %s6, %s255
      %p257 = scmp.lt.s32.totalorder %s17, 1
      %s258 = scalar_select %p257, %s17, 1
      %s259 = smul.addr %s258, 3
      %s260 = smul.addr %s259, 4
      %s261 = scalar_lea.vmem %s0, %s260
      %p262 = scmp.lt.s32.totalorder %s17, 1
      %s263 = scalar_select %p262, %s17, 1
      %s264 = smul.addr %s263, 3
      %s265 = smul.addr %s264, 4
      %s266 = scalar_lea.vmem %s1, %s265
      %p267 = scmp.lt.s32.totalorder %s17, 1
      %s268 = scalar_select %p267, %s17, 1
      %s269 = smul.addr %s268, 3
      %s270 = smul.addr %s269, 4
      %s271 = scalar_lea.vmem %s6, %s270
      %272 = vst [vmem:[#allocation2] sm:$0xff] 0.0
      %vm273 = vcmask 154624
      %274 = vst.msk [vmem:[#allocation2 + $0x20] sm:$0xff] %vm273, 0.0
      %v275 = vld [vmem:[%s261] sm:$0xff]
      %v276 = vld [vmem:[%s261 + $0x8] sm:$0xf]
      %v277 = vld [vmem:[%s266] sm:$0xff]
      %v278 = vld [vmem:[%s266 + $0x8] sm:$0xf]
      %v280 = vcombine.high %v275, %v275
      %282 = vst [vmem:[#allocation2 + $0x8] sm:$0xf] %v275
      %283 = vst [vmem:[#allocation2 + $0x10] sm:$0xf] %v280
      %284 = vst [vmem:[#allocation2 + $0x18] sm:$0xf] %v276
      %v287 = vcombine.low %v277, %v277
      %v288 = vcombine.low %v278, %v278
      %291 = vst [vmem:[#allocation2 + $0x8] sm:$0xf0] %v287
      %292 = vst [vmem:[#allocation2 + $0x10] sm:$0xf0] %v277
      %293 = vst [vmem:[#allocation2 + $0x18] sm:$0xf0] %v288
      %v294 = vld [vmem:[#allocation2] sm:$0xff]
      %v295 = vld [vmem:[#allocation2 + $0x8] sm:$0xff]
      %v296 = vld [vmem:[#allocation2 + $0x10] sm:$0xff]
      %v297 = vld [vmem:[#allocation2 + $0x18] sm:$0xff]
      %302 = vrot.lane.b32.xlu0 %v294, 19
      %v303 = vpop.permute.xlu0 %302
      %304 = vrot.lane.b32.xlu0 %v295, 19
      %v305 = vpop.permute.xlu0 %304
      %306 = vrot.lane.b32.xlu0 %v296, 19
      %v307 = vpop.permute.xlu0 %306
      %308 = vrot.lane.b32.xlu0 %v297, 19
      %v309 = vpop.permute.xlu0 %308
      %v310 = vsel %vm273, %v303, %v305
      %v311 = vsel %vm273, %v305, %v307
      %v312 = vsel %vm273, %v307, %v309
      %316 = vst [vmem:[#allocation3] sm:$0xff] %v310
      %317 = vst [vmem:[#allocation3 + $0x8] sm:$0xff] %v311
      %318 = vst [vmem:[#allocation3 + $0x10] sm:$0xff] %v312
      %v319 = vld [vmem:[#allocation2] sm:$0xff]
      %v320 = vld [vmem:[#allocation2 + $0x8] sm:$0xff]
      %v321 = vld [vmem:[#allocation2 + $0x10] sm:$0xff]
      %v322 = vld [vmem:[#allocation2 + $0x18] sm:$0xff]
      %327 = vrot.lane.b32.xlu0 %v319, 18
      %v328 = vpop.permute.xlu0 %327
      %329 = vrot.lane.b32.xlu0 %v320, 18
      %v330 = vpop.permute.xlu0 %329
      %331 = vrot.lane.b32.xlu0 %v321, 18
      %v332 = vpop.permute.xlu0 %331
      %333 = vrot.lane.b32.xlu0 %v322, 18
      %v334 = vpop.permute.xlu0 %333
      %vm335 = vcmask 146432
      %v336 = vsel %vm335, %v328, %v330
      %v337 = vsel %vm335, %v330, %v332
      %v338 = vsel %vm335, %v332, %v334
      %342 = vst [vmem:[#allocation3 + $0x18] sm:$0xff] %v336
      %343 = vst [vmem:[#allocation3 + $0x20] sm:$0xff] %v337
      %344 = vst [vmem:[#allocation3 + $0x28] sm:$0xff] %v338
      %v345 = vld [vmem:[#allocation2] sm:$0xff]
      %v346 = vld [vmem:[#allocation2 + $0x8] sm:$0xff]
      %v347 = vld [vmem:[#allocation2 + $0x10] sm:$0xff]
      %v348 = vld [vmem:[#allocation2 + $0x18] sm:$0xff]
      %353 = vrot.lane.b32.xlu0 %v345, 17
      %v354 = vpop.permute.xlu0 %353
      %355 = vrot.lane.b32.xlu0 %v346, 17
      %v356 = vpop.permute.xlu0 %355
      %357 = vrot.lane.b32.xlu0 %v347, 17
      %v358 = vpop.permute.xlu0 %357
      %359 = vrot.lane.b32.xlu0 %v348, 17
      %v360 = vpop.permute.xlu0 %359
      %vm361 = vcmask 138240
      %v362 = vsel %vm361, %v354, %v356
      %v363 = vsel %vm361, %v356, %v358
      %v364 = vsel %vm361, %v358, %v360
      %368 = vst [vmem:[#allocation3 + $0x30] sm:$0xff] %v362
      %369 = vst [vmem:[#allocation3 + $0x38] sm:$0xff] %v363
      %370 = vst [vmem:[#allocation3 + $0x40] sm:$0xff] %v364
      %v371 = vld [vmem:[#allocation2] sm:$0xff]
      %v372 = vld [vmem:[#allocation2 + $0x8] sm:$0xff]
      %v373 = vld [vmem:[#allocation2 + $0x10] sm:$0xff]
      %v374 = vld [vmem:[#allocation2 + $0x18] sm:$0xff]
      %379 = vrot.lane.b32.xlu0 %v371, 1
      %v380 = vpop.permute.xlu0 %379
      %381 = vrot.lane.b32.xlu0 %v372, 1
      %v382 = vpop.permute.xlu0 %381
      %383 = vrot.lane.b32.xlu0 %v373, 1
      %v384 = vpop.permute.xlu0 %383
      %385 = vrot.lane.b32.xlu0 %v374, 1
      %v386 = vpop.permute.xlu0 %385
      %vm387 = vcmask 7168
      %v388 = vsel %vm387, %v380, %v382
      %v389 = vsel %vm387, %v382, %v384
      %v390 = vsel %vm387, %v384, %v386
      %394 = vst [vmem:[#allocation3 + $0x48] sm:$0xff] %v388
      %395 = vst [vmem:[#allocation3 + $0x50] sm:$0xff] %v389
      %396 = vst [vmem:[#allocation3 + $0x58] sm:$0xff] %v390
      %v397 = vld [vmem:[#allocation2 + $0x8] sm:$0xff]
      %v398 = vld [vmem:[#allocation2 + $0x10] sm:$0xff]
      %v399 = vld [vmem:[#allocation2 + $0x18] sm:$0xff]
      %400 = vst [vmem:[#allocation3 + $0x60] sm:$0xff] %v397
      %401 = vst [vmem:[#allocation3 + $0x68] sm:$0xff] %v398
      %402 = vst [vmem:[#allocation3 + $0x70] sm:$0xff] %v399
      %v403 = vld [vmem:[#allocation2 + $0x8] sm:$0xff]
      %v404 = vld [vmem:[#allocation2 + $0x10] sm:$0xff]
      %v405 = vld [vmem:[#allocation2 + $0x18] sm:$0xff]
      %v406 = vld [vmem:[#allocation2 + $0x20] sm:$0xff]
      %411 = vrot.lane.b32.xlu0 %v403, 127
      %v412 = vpop.permute.xlu0 %411
      %413 = vrot.lane.b32.xlu0 %v404, 127
      %v414 = vpop.permute.xlu0 %413
      %415 = vrot.lane.b32.xlu0 %v405, 127
      %v416 = vpop.permute.xlu0 %415
      %417 = vrot.lane.b32.xlu0 %v406, 127
      %v418 = vpop.permute.xlu0 %417
      %vm419 = vcmask 1039360
      %v420 = vsel %vm419, %v412, %v414
      %v421 = vsel %vm419, %v414, %v416
      %v422 = vsel %vm419, %v416, %v418
      %426 = vst [vmem:[#allocation3 + $0x78] sm:$0xff] %v420
      %427 = vst [vmem:[#allocation3 + $0x80] sm:$0xff] %v421
      %428 = vst [vmem:[#allocation3 + $0x88] sm:$0xff] %v422
      %v429 = vld [vmem:[#allocation2 + $0x8] sm:$0xff]
      %v430 = vld [vmem:[#allocation2 + $0x10] sm:$0xff]
      %v431 = vld [vmem:[#allocation2 + $0x18] sm:$0xff]
      %v432 = vld [vmem:[#allocation2 + $0x20] sm:$0xff]
      %437 = vrot.lane.b32.xlu0 %v429, 111
      %v438 = vpop.permute.xlu0 %437
      %439 = vrot.lane.b32.xlu0 %v430, 111
      %v440 = vpop.permute.xlu0 %439
      %441 = vrot.lane.b32.xlu0 %v431, 111
      %v442 = vpop.permute.xlu0 %441
      %443 = vrot.lane.b32.xlu0 %v432, 111
      %v444 = vpop.permute.xlu0 %443
      %vm445 = vcmask 908288
      %v446 = vsel %vm445, %v438, %v440
      %v447 = vsel %vm445, %v440, %v442
      %v448 = vsel %vm445, %v442, %v444
      %452 = vst [vmem:[#allocation3 + $0x90] sm:$0xff] %v446
      %453 = vst [vmem:[#allocation3 + $0x98] sm:$0xff] %v447
      %454 = vst [vmem:[#allocation3 + $0xa0] sm:$0xff] %v448
      %v455 = vld [vmem:[#allocation2 + $0x8] sm:$0xff]
      %v456 = vld [vmem:[#allocation2 + $0x10] sm:$0xff]
      %v457 = vld [vmem:[#allocation2 + $0x18] sm:$0xff]
      %v458 = vld [vmem:[#allocation2 + $0x20] sm:$0xff]
      %463 = vrot.lane.b32.xlu0 %v455, 110
      %v464 = vpop.permute.xlu0 %463
      %465 = vrot.lane.b32.xlu0 %v456, 110
      %v466 = vpop.permute.xlu0 %465
      %467 = vrot.lane.b32.xlu0 %v457, 110
      %v468 = vpop.permute.xlu0 %467
      %469 = vrot.lane.b32.xlu0 %v458, 110
      %v470 = vpop.permute.xlu0 %469
      %vm471 = vcmask 900096
      %v472 = vsel %vm471, %v464, %v466
      %v473 = vsel %vm471, %v466, %v468
      %v474 = vsel %vm471, %v468, %v470
      %478 = vst [vmem:[#allocation3 + $0xa8] sm:$0xff] %v472
      %479 = vst [vmem:[#allocation3 + $0xb0] sm:$0xff] %v473
      %480 = vst [vmem:[#allocation3 + $0xb8] sm:$0xff] %v474
      %v481 = vld [vmem:[#allocation2 + $0x8] sm:$0xff]
      %v482 = vld [vmem:[#allocation2 + $0x10] sm:$0xff]
      %v483 = vld [vmem:[#allocation2 + $0x18] sm:$0xff]
      %v484 = vld [vmem:[#allocation2 + $0x20] sm:$0xff]
      %489 = vrot.lane.b32.xlu0 %v481, 109
      %v490 = vpop.permute.xlu0 %489
      %491 = vrot.lane.b32.xlu0 %v482, 109
      %v492 = vpop.permute.xlu0 %491
      %493 = vrot.lane.b32.xlu0 %v483, 109
      %v494 = vpop.permute.xlu0 %493
      %495 = vrot.lane.b32.xlu0 %v484, 109
      %v496 = vpop.permute.xlu0 %495
      %vm497 = vcmask 891904
      %v498 = vsel %vm497, %v490, %v492
      %v499 = vsel %vm497, %v492, %v494
      %v500 = vsel %vm497, %v494, %v496
      %504 = vst [vmem:[#allocation3 + $0xc0] sm:$0xff] %v498
      %505 = vst [vmem:[#allocation3 + $0xc8] sm:$0xff] %v499
      %506 = vst [vmem:[#allocation3 + $0xd0] sm:$0xff] %v500
      %v507 = vld [vmem:[%s2] sm:$0xff]
      %v508 = vld [vmem:[%s2 + $0x8] sm:$0xff]
      %v509 = vld [vmem:[%s2 + $0x10] sm:$0xff]
      %v510 = vld [vmem:[#allocation3] sm:$0xff]
      %v511 = vld [vmem:[#allocation3 + $0x8] sm:$0xff]
      %v512 = vld [vmem:[#allocation3 + $0x10] sm:$0xff]
      %v513 = vld [vmem:[#allocation3 + $0x18] sm:$0xff]
      %v514 = vld [vmem:[#allocation3 + $0x20] sm:$0xff]
      %v515 = vld [vmem:[#allocation3 + $0x28] sm:$0xff]
      %v516 = vld [vmem:[#allocation3 + $0x30] sm:$0xff]
      %v517 = vld [vmem:[#allocation3 + $0x38] sm:$0xff]
      %v518 = vld [vmem:[#allocation3 + $0x40] sm:$0xff]
      %v519 = vld [vmem:[#allocation3 + $0x48] sm:$0xff]
      %v520 = vld [vmem:[#allocation3 + $0x50] sm:$0xff]
      %v521 = vld [vmem:[#allocation3 + $0x58] sm:$0xff]
      %v522 = vld [vmem:[#allocation3 + $0x60] sm:$0xff]
      %v523 = vld [vmem:[#allocation3 + $0x68] sm:$0xff]
      %v524 = vld [vmem:[#allocation3 + $0x70] sm:$0xff]
      %v525 = vld [vmem:[#allocation3 + $0x78] sm:$0xff]
      %v526 = vld [vmem:[#allocation3 + $0x80] sm:$0xff]
      %v527 = vld [vmem:[#allocation3 + $0x88] sm:$0xff]
      %v528 = vld [vmem:[#allocation3 + $0x90] sm:$0xff]
      %v529 = vld [vmem:[#allocation3 + $0x98] sm:$0xff]
      %v530 = vld [vmem:[#allocation3 + $0xa0] sm:$0xff]
      %v531 = vld [vmem:[#allocation3 + $0xa8] sm:$0xff]
      %v532 = vld [vmem:[#allocation3 + $0xb0] sm:$0xff]
      %v533 = vld [vmem:[#allocation3 + $0xb8] sm:$0xff]
      %v534 = vld [vmem:[#allocation3 + $0xc0] sm:$0xff]
      %v535 = vld [vmem:[#allocation3 + $0xc8] sm:$0xff]
      %v536 = vld [vmem:[#allocation3 + $0xd0] sm:$0xff]
      %v537 = vld [vmem:[%s3] sm:$0xff]
      %v538 = vld [vmem:[%s3 + $0x8] sm:$0xff]
      %v539 = vld [vmem:[%s3 + $0x10] sm:$0xff]
      %541 = vset.pattern.permute.xlu0 0
      %542 = vperm.xlu0 %541, %v537
      %v543 = vpop.permute.xlu0 %542
      %546 = vset.pattern.permute.xlu0 0
      %547 = vperm.xlu0 %546, %v538
      %v548 = vpop.permute.xlu0 %547
      %551 = vset.pattern.permute.xlu0 0
      %552 = vperm.xlu0 %551, %v539
      %v553 = vpop.permute.xlu0 %552
      %vm555 = vcmask 588800
      %v557 = vsel %vm555, %v507, 0
      %v560 = vsel %vm555, %v508, 0
      %v563 = vsel %vm555, %v509, 0
      %565 = vmatprep.subr.mxu0 0.0
      %566 = vmatpush1.msra.mxu0 0.0
      %567 = vmatprep.subr.mxu0 0.0
      %568 = vmatpush1.msra.mxu0 0.0
      %569 = vmatprep.subr.mxu0 0.0
      %570 = vmatpush1.msra.mxu0 0.0
      %571 = vmatprep.subr.mxu0 0.0
      %572 = vmatpush1.msra.mxu0 0.0
      %573 = vmatprep.subr.mxu0 0.0
      %574 = vmatpush1.msra.mxu0 0.0
      %575 = vmatprep.subr.mxu0 0.0
      %576 = vmatpush1.msra.mxu0 0.0
      %577 = vmatprep.subr.mxu0 0.0
      %578 = vmatpush1.msra.mxu0 0.0
      %579 = vmatprep.subr.mxu0 %v535
      %580 = vmatpush1.msra.mxu0 %v534
      %581 = vmatprep.subr.mxu0 %v532
      %582 = vmatpush1.msra.mxu0 %v531
      %583 = vmatprep.subr.mxu0 %v529
      %584 = vmatpush1.msra.mxu0 %v528
      %585 = vmatprep.subr.mxu0 %v526
      %586 = vmatpush1.msra.mxu0 %v525
      %587 = vmatprep.subr.mxu0 %v523
      %588 = vmatpush1.msra.mxu0 %v522
      %589 = vmatprep.subr.mxu0 %v520
      %590 = vmatpush1.msra.mxu0 %v519
      %591 = vmatprep.subr.mxu0 %v517
      %592 = vmatpush1.msra.mxu0 %v516
      %593 = vmatprep.subr.mxu0 %v514
      %594 = vmatpush1.msra.mxu0 %v513
      %595 = vmatprep.subr.mxu0 %v511
      %596 = vmatpush1.msra.mxu0 %v510
      %597 = vmatprep.subr.mxu0 0.0
      %598 = vmatpush2.msra.mxu0 0.0
      %599 = vmatprep.subr.mxu0 0.0
      %600 = vmatpush2.msra.mxu0 0.0
      %601 = vmatprep.subr.mxu0 0.0
      %602 = vmatpush2.msra.mxu0 0.0
      %603 = vmatprep.subr.mxu0 0.0
      %604 = vmatpush2.msra.mxu0 0.0
      %605 = vmatprep.subr.mxu0 0.0
      %606 = vmatpush2.msra.mxu0 0.0
      %607 = vmatprep.subr.mxu0 0.0
      %608 = vmatpush2.msra.mxu0 0.0
      %609 = vmatprep.subr.mxu0 0.0
      %610 = vmatpush2.msra.mxu0 0.0
      %611 = vmatprep.subr.mxu0 0.0
      %612 = vmatpush2.msra.mxu0 0.0
      %613 = vmatprep.subr.mxu0 0.0
      %614 = vmatpush2.msra.mxu0 0.0
      %615 = vmatprep.subr.mxu0 0.0
      %616 = vmatpush2.msra.mxu0 0.0
      %617 = vmatprep.subr.mxu0 0.0
      %618 = vmatpush2.msra.mxu0 0.0
      %619 = vmatprep.subr.mxu0 0.0
      %620 = vmatpush2.msra.mxu0 0.0
      %621 = vmatprep.subr.mxu0 0.0
      %622 = vmatpush2.msra.mxu0 0.0
      %623 = vmatprep.subr.mxu0 0.0
      %624 = vmatpush2.msra.mxu0 0.0
      %625 = vmatprep.subr.mxu0 0.0
      %626 = vmatpush2.msra.mxu0 0.0
      %627 = vmatprep.subr.mxu0 0.0
      %628 = vmatpush2.msra.mxu0 0.0
      %629 = vmatprep.mubr.f32.mxu0 0.0
      %630 = vmatmul.mubr.f32.gmra.mxu0 %v557
      %v631 = vpop.f32.mrf.mxu0
      %v632 = vadd.f32 %v543, %v631
      %v633 = vpop.f32.mrf.mxu0
      %v634 = vadd.f32 %v543, %v633
      %635 = vmatprep.mubr.f32.mxu0 0.0
      %636 = vmatmul.mubr.f32.gmra.mxu0 %v560
      %v637 = vpop.f32.mrf.mxu0
      %v638 = vadd.f32 %v548, %v637
      %v639 = vpop.f32.mrf.mxu0
      %v640 = vadd.f32 %v548, %v639
      %641 = vmatprep.mubr.f32.mxu0 0.0
      %642 = vmatmul.mubr.f32.gmra.mxu0 %v563
      %v643 = vpop.f32.mrf.mxu0
      %v644 = vadd.f32 %v553, %v643
      %v645 = vpop.f32.mrf.mxu0
      %v646 = vadd.f32 %v553, %v645
      %647 = vdwg.mxu0
      %648 = vmatprep.subr.mxu0 0.0
      %649 = vmatpush1.msra.mxu0 0.0
      %650 = vmatprep.subr.mxu0 0.0
      %651 = vmatpush1.msra.mxu0 0.0
      %652 = vmatprep.subr.mxu0 0.0
      %653 = vmatpush1.msra.mxu0 0.0
      %654 = vmatprep.subr.mxu0 0.0
      %655 = vmatpush1.msra.mxu0 0.0
      %656 = vmatprep.subr.mxu0 0.0
      %657 = vmatpush1.msra.mxu0 0.0
      %658 = vmatprep.subr.mxu0 0.0
      %659 = vmatpush1.msra.mxu0 0.0
      %660 = vmatprep.subr.mxu0 0.0
      %661 = vmatpush1.msra.mxu0 0.0
      %662 = vmatprep.subr.mxu0 0.0
      %663 = vmatpush1.msra.mxu0 %v536
      %664 = vmatprep.subr.mxu0 0.0
      %665 = vmatpush1.msra.mxu0 %v533
      %666 = vmatprep.subr.mxu0 0.0
      %667 = vmatpush1.msra.mxu0 %v530
      %668 = vmatprep.subr.mxu0 0.0
      %669 = vmatpush1.msra.mxu0 %v527
      %670 = vmatprep.subr.mxu0 0.0
      %671 = vmatpush1.msra.mxu0 %v524
      %672 = vmatprep.subr.mxu0 0.0
      %673 = vmatpush1.msra.mxu0 %v521
      %674 = vmatprep.subr.mxu0 0.0
      %675 = vmatpush1.msra.mxu0 %v518
      %676 = vmatprep.subr.mxu0 0.0
      %677 = vmatpush1.msra.mxu0 %v515
      %678 = vmatprep.subr.mxu0 0.0
      %679 = vmatpush1.msra.mxu0 %v512
      %680 = vmatprep.subr.mxu0 0.0
      %681 = vmatpush2.msra.mxu0 0.0
      %682 = vmatprep.subr.mxu0 0.0
      %683 = vmatpush2.msra.mxu0 0.0
      %684 = vmatprep.subr.mxu0 0.0
      %685 = vmatpush2.msra.mxu0 0.0
      %686 = vmatprep.subr.mxu0 0.0
      %687 = vmatpush2.msra.mxu0 0.0
      %688 = vmatprep.subr.mxu0 0.0
      %689 = vmatpush2.msra.mxu0 0.0
      %690 = vmatprep.subr.mxu0 0.0
      %691 = vmatpush2.msra.mxu0 0.0
      %692 = vmatprep.subr.mxu0 0.0
      %693 = vmatpush2.msra.mxu0 0.0
      %694 = vmatprep.subr.mxu0 0.0
      %695 = vmatpush2.msra.mxu0 0.0
      %696 = vmatprep.subr.mxu0 0.0
      %697 = vmatpush2.msra.mxu0 0.0
      %698 = vmatprep.subr.mxu0 0.0
      %699 = vmatpush2.msra.mxu0 0.0
      %700 = vmatprep.subr.mxu0 0.0
      %701 = vmatpush2.msra.mxu0 0.0
      %702 = vmatprep.subr.mxu0 0.0
      %703 = vmatpush2.msra.mxu0 0.0
      %704 = vmatprep.subr.mxu0 0.0
      %705 = vmatpush2.msra.mxu0 0.0
      %706 = vmatprep.subr.mxu0 0.0
      %707 = vmatpush2.msra.mxu0 0.0
      %708 = vmatprep.subr.mxu0 0.0
      %709 = vmatpush2.msra.mxu0 0.0
      %710 = vmatprep.subr.mxu0 0.0
      %711 = vmatpush2.msra.mxu0 0.0
      %712 = vmatprep.mubr.f32.mxu0 0.0
      %713 = vmatmul.mubr.f32.gmra.mxu0 %v557
      %v714 = vpop.f32.mrf.mxu0
      %v715 = vadd.f32 %v543, %v714
      %v716 = vpop.f32.mrf.mxu0
      %717 = vmatprep.mubr.f32.mxu0 0.0
      %718 = vmatmul.mubr.f32.gmra.mxu0 %v560
      %v719 = vpop.f32.mrf.mxu0
      %v720 = vadd.f32 %v548, %v719
      %v721 = vpop.f32.mrf.mxu0
      %722 = vmatprep.mubr.f32.mxu0 0.0
      %723 = vmatmul.mubr.f32.gmra.mxu0 %v563
      %v724 = vpop.f32.mrf.mxu0
      %v725 = vadd.f32 %v553, %v724
      %v726 = vpop.f32.mrf.mxu0
      %727 = vdwg.mxu0
      %v728 = vxor.u32 %v632, 2147483648
      %v729 = vxor.u32 %v634, 2147483648
      %v730 = vxor.u32 %v715, 2147483648
      %v731 = vmul.f32 %v728, 1.442695
      %v732 = vpow.pop %v731
      %v733 = vmul.f32 %v729, 1.442695
      %v734 = vpow.pop %v733
      %v735 = vmul.f32 %v730, 1.442695
      %v736 = vpow.pop %v735
      %v737 = vadd.f32 %v732, 1.0
      %v738 = vadd.f32 %v734, 1.0
      %v739 = vadd.f32 %v736, 1.0
      %v740 = vrcp.pop %v737
      %v741 = vmul.f32 1.0, %v740
      %v742 = vrcp.pop %v738
      %v743 = vmul.f32 1.0, %v742
      %v744 = vrcp.pop %v739
      %v745 = vmul.f32 1.0, %v744
      %v746 = vxor.u32 %v638, 2147483648
      %v747 = vxor.u32 %v640, 2147483648
      %v748 = vxor.u32 %v720, 2147483648
      %v749 = vmul.f32 %v746, 1.442695
      %v750 = vpow.pop %v749
      %v751 = vmul.f32 %v747, 1.442695
      %v752 = vpow.pop %v751
      %v753 = vmul.f32 %v748, 1.442695
      %v754 = vpow.pop %v753
      %v755 = vadd.f32 %v750, 1.0
      %v756 = vadd.f32 %v752, 1.0
      %v757 = vadd.f32 %v754, 1.0
      %v758 = vrcp.pop %v755
      %v759 = vmul.f32 1.0, %v758
      %v760 = vrcp.pop %v756
      %v761 = vmul.f32 1.0, %v760
      %v762 = vrcp.pop %v757
      %v763 = vmul.f32 1.0, %v762
      %v764 = vcombine.high %v277, %v277
      %v766 = vmul.f32 %v741, %v277
      %v767 = vmul.f32 %v743, %v764
      %v768 = vmul.f32 %v745, %v278
      %v772 = vrot.slane %v766, 4
      %v773 = vrot.slane %v767, 4
      %v774 = vrot.slane %v768, 4
      %778 = vst [vmem:[#allocation2 + $0x8] sm:$0xf0] %v772
      %779 = vst [vmem:[#allocation2 + $0x10] sm:$0xf0] %v773
      %780 = vst [vmem:[#allocation2 + $0x18] sm:$0xf0] %v774
      %v781 = vld [vmem:[#allocation2] sm:$0xf0]
      %v782 = vld [vmem:[#allocation2 + $0x8] sm:$0xf0]
      %v783 = vld [vmem:[#allocation2 + $0x10] sm:$0xf0]
      %v784 = vld [vmem:[#allocation2 + $0x18] sm:$0xf0]
      %v789 = vrot.slane %v781, 4
      %v790 = vrot.slane %v782, 4
      %v791 = vrot.slane %v783, 4
      %v792 = vrot.slane %v784, 4
      %793 = vrot.lane.b32.xlu0 %v789, 19
      %v794 = vpop.permute.xlu0 %793
      %795 = vrot.lane.b32.xlu0 %v790, 19
      %v796 = vpop.permute.xlu0 %795
      %797 = vrot.lane.b32.xlu0 %v791, 19
      %v798 = vpop.permute.xlu0 %797
      %799 = vrot.lane.b32.xlu0 %v792, 19
      %v800 = vpop.permute.xlu0 %799
      %v801 = vsel %vm273, %v794, %v796
      %v802 = vsel %vm273, %v796, %v798
      %v803 = vsel %vm273, %v798, %v800
      %807 = vst [vmem:[#allocation4] sm:$0xf] %v801
      %808 = vst [vmem:[#allocation4 + $0x8] sm:$0xf] %v802
      %809 = vst [vmem:[#allocation4 + $0x10] sm:$0xf] %v803
      %v810 = vld [vmem:[#allocation2] sm:$0xf0]
      %v811 = vld [vmem:[#allocation2 + $0x8] sm:$0xf0]
      %v812 = vld [vmem:[#allocation2 + $0x10] sm:$0xf0]
      %v813 = vld [vmem:[#allocation2 + $0x18] sm:$0xf0]
      %818 = vrot.lane.b32.xlu0 %v810, 18
      %v819 = vpop.permute.xlu0 %818
      %820 = vrot.lane.b32.xlu0 %v811, 18
      %v821 = vpop.permute.xlu0 %820
      %822 = vrot.lane.b32.xlu0 %v812, 18
      %v823 = vpop.permute.xlu0 %822
      %824 = vrot.lane.b32.xlu0 %v813, 18
      %v825 = vpop.permute.xlu0 %824
      %v826 = vsel %vm335, %v819, %v821
      %v827 = vsel %vm335, %v821, %v823
      %v828 = vsel %vm335, %v823, %v825
      %832 = vst [vmem:[#allocation4] sm:$0xf0] %v826
      %833 = vst [vmem:[#allocation4 + $0x8] sm:$0xf0] %v827
      %834 = vst [vmem:[#allocation4 + $0x10] sm:$0xf0] %v828
      %v835 = vld [vmem:[#allocation2] sm:$0xf0]
      %v836 = vld [vmem:[#allocation2 + $0x8] sm:$0xf0]
      %v837 = vld [vmem:[#allocation2 + $0x10] sm:$0xf0]
      %v838 = vld [vmem:[#allocation2 + $0x18] sm:$0xf0]
      %v843 = vrot.slane %v835, 4
      %v844 = vrot.slane %v836, 4
      %v845 = vrot.slane %v837, 4
      %v846 = vrot.slane %v838, 4
      %847 = vrot.lane.b32.xlu0 %v843, 17
      %v848 = vpop.permute.xlu0 %847
      %849 = vrot.lane.b32.xlu0 %v844, 17
      %v850 = vpop.permute.xlu0 %849
      %851 = vrot.lane.b32.xlu0 %v845, 17
      %v852 = vpop.permute.xlu0 %851
      %853 = vrot.lane.b32.xlu0 %v846, 17
      %v854 = vpop.permute.xlu0 %853
      %v855 = vsel %vm361, %v848, %v850
      %v856 = vsel %vm361, %v850, %v852
      %v857 = vsel %vm361, %v852, %v854
      %861 = vst [vmem:[#allocation4 + $0x18] sm:$0xf] %v855
      %862 = vst [vmem:[#allocation4 + $0x20] sm:$0xf] %v856
      %863 = vst [vmem:[#allocation4 + $0x28] sm:$0xf] %v857
      %v864 = vld [vmem:[#allocation2] sm:$0xf0]
      %v865 = vld [vmem:[#allocation2 + $0x8] sm:$0xf0]
      %v866 = vld [vmem:[#allocation2 + $0x10] sm:$0xf0]
      %v867 = vld [vmem:[#allocation2 + $0x18] sm:$0xf0]
      %872 = vrot.lane.b32.xlu0 %v864, 1
      %v873 = vpop.permute.xlu0 %872
      %874 = vrot.lane.b32.xlu0 %v865, 1
      %v875 = vpop.permute.xlu0 %874
      %876 = vrot.lane.b32.xlu0 %v866, 1
      %v877 = vpop.permute.xlu0 %876
      %878 = vrot.lane.b32.xlu0 %v867, 1
      %v879 = vpop.permute.xlu0 %878
      %v880 = vsel %vm387, %v873, %v875
      %v881 = vsel %vm387, %v875, %v877
      %v882 = vsel %vm387, %v877, %v879
      %886 = vst [vmem:[#allocation4 + $0x18] sm:$0xf0] %v880
      %887 = vst [vmem:[#allocation4 + $0x20] sm:$0xf0] %v881
      %888 = vst [vmem:[#allocation4 + $0x28] sm:$0xf0] %v882
      %v889 = vld [vmem:[#allocation2 + $0x8] sm:$0xf0]
      %v890 = vld [vmem:[#allocation2 + $0x10] sm:$0xf0]
      %v891 = vld [vmem:[#allocation2 + $0x18] sm:$0xf0]
      %v895 = vrot.slane %v889, 4
      %v896 = vrot.slane %v890, 4
      %v897 = vrot.slane %v891, 4
      %901 = vst [vmem:[#allocation4 + $0x30] sm:$0xf] %v895
      %902 = vst [vmem:[#allocation4 + $0x38] sm:$0xf] %v896
      %903 = vst [vmem:[#allocation4 + $0x40] sm:$0xf] %v897
      %v904 = vld [vmem:[#allocation2 + $0x8] sm:$0xf0]
      %v905 = vld [vmem:[#allocation2 + $0x10] sm:$0xf0]
      %v906 = vld [vmem:[#allocation2 + $0x18] sm:$0xf0]
      %v907 = vld [vmem:[#allocation2 + $0x20] sm:$0xf0]
      %912 = vrot.lane.b32.xlu0 %v904, 127
      %v913 = vpop.permute.xlu0 %912
      %914 = vrot.lane.b32.xlu0 %v905, 127
      %v915 = vpop.permute.xlu0 %914
      %916 = vrot.lane.b32.xlu0 %v906, 127
      %v917 = vpop.permute.xlu0 %916
      %918 = vrot.lane.b32.xlu0 %v907, 127
      %v919 = vpop.permute.xlu0 %918
      %v920 = vsel %vm419, %v913, %v915
      %v921 = vsel %vm419, %v915, %v917
      %v922 = vsel %vm419, %v917, %v919
      %926 = vst [vmem:[#allocation4 + $0x30] sm:$0xf0] %v920
      %927 = vst [vmem:[#allocation4 + $0x38] sm:$0xf0] %v921
      %928 = vst [vmem:[#allocation4 + $0x40] sm:$0xf0] %v922
      %v929 = vld [vmem:[#allocation2 + $0x8] sm:$0xf0]
      %v930 = vld [vmem:[#allocation2 + $0x10] sm:$0xf0]
      %v931 = vld [vmem:[#allocation2 + $0x18] sm:$0xf0]
      %v932 = vld [vmem:[#allocation2 + $0x20] sm:$0xf0]
      %v937 = vrot.slane %v929, 4
      %v938 = vrot.slane %v930, 4
      %v939 = vrot.slane %v931, 4
      %v940 = vrot.slane %v932, 4
      %941 = vrot.lane.b32.xlu0 %v937, 111
      %v942 = vpop.permute.xlu0 %941
      %943 = vrot.lane.b32.xlu0 %v938, 111
      %v944 = vpop.permute.xlu0 %943
      %945 = vrot.lane.b32.xlu0 %v939, 111
      %v946 = vpop.permute.xlu0 %945
      %947 = vrot.lane.b32.xlu0 %v940, 111
      %v948 = vpop.permute.xlu0 %947
      %v949 = vsel %vm445, %v942, %v944
      %v950 = vsel %vm445, %v944, %v946
      %v951 = vsel %vm445, %v946, %v948
      %955 = vst [vmem:[#allocation4 + $0x48] sm:$0xf] %v949
      %956 = vst [vmem:[#allocation4 + $0x50] sm:$0xf] %v950
      %957 = vst [vmem:[#allocation4 + $0x58] sm:$0xf] %v951
      %v958 = vld [vmem:[#allocation2 + $0x8] sm:$0xf0]
      %v959 = vld [vmem:[#allocation2 + $0x10] sm:$0xf0]
      %v960 = vld [vmem:[#allocation2 + $0x18] sm:$0xf0]
      %v961 = vld [vmem:[#allocation2 + $0x20] sm:$0xf0]
      %966 = vrot.lane.b32.xlu0 %v958, 110
      %v967 = vpop.permute.xlu0 %966
      %968 = vrot.lane.b32.xlu0 %v959, 110
      %v969 = vpop.permute.xlu0 %968
      %970 = vrot.lane.b32.xlu0 %v960, 110
      %v971 = vpop.permute.xlu0 %970
      %972 = vrot.lane.b32.xlu0 %v961, 110
      %v973 = vpop.permute.xlu0 %972
      %v974 = vsel %vm471, %v967, %v969
      %v975 = vsel %vm471, %v969, %v971
      %v976 = vsel %vm471, %v971, %v973
      %980 = vst [vmem:[#allocation4 + $0x48] sm:$0xf0] %v974
      %981 = vst [vmem:[#allocation4 + $0x50] sm:$0xf0] %v975
      %982 = vst [vmem:[#allocation4 + $0x58] sm:$0xf0] %v976
      %v983 = vld [vmem:[#allocation2 + $0x8] sm:$0xf0]
      %v984 = vld [vmem:[#allocation2 + $0x10] sm:$0xf0]
      %v985 = vld [vmem:[#allocation2 + $0x18] sm:$0xf0]
      %v986 = vld [vmem:[#allocation2 + $0x20] sm:$0xf0]
      %v991 = vrot.slane %v983, 4
      %v992 = vrot.slane %v984, 4
      %v993 = vrot.slane %v985, 4
      %v994 = vrot.slane %v986, 4
      %995 = vrot.lane.b32.xlu0 %v991, 109
      %v996 = vpop.permute.xlu0 %995
      %997 = vrot.lane.b32.xlu0 %v992, 109
      %v998 = vpop.permute.xlu0 %997
      %999 = vrot.lane.b32.xlu0 %v993, 109
      %v1000 = vpop.permute.xlu0 %999
      %1001 = vrot.lane.b32.xlu0 %v994, 109
      %v1002 = vpop.permute.xlu0 %1001
      %v1003 = vsel %vm497, %v996, %v998
      %v1004 = vsel %vm497, %v998, %v1000
      %v1005 = vsel %vm497, %v1000, %v1002
      %1009 = vst [vmem:[#allocation4 + $0x60] sm:$0xf] %v1003
      %1010 = vst [vmem:[#allocation4 + $0x68] sm:$0xf] %v1004
      %1011 = vst [vmem:[#allocation4 + $0x70] sm:$0xf] %v1005
      %1012 = vst [vmem:[#allocation4 + $0x60] sm:$0xf0] 0.0
      %1013 = vst [vmem:[#allocation4 + $0x68] sm:$0xf0] 0.0
      %1014 = vst [vmem:[#allocation4 + $0x70] sm:$0xf0] 0.0
      %v1015 = vld [vmem:[%s4] sm:$0xff]
      %v1016 = vld [vmem:[#allocation4] sm:$0xff]
      %v1017 = vld [vmem:[#allocation4 + $0x8] sm:$0xff]
      %v1018 = vld [vmem:[#allocation4 + $0x10] sm:$0xff]
      %v1019 = vld [vmem:[#allocation4 + $0x18] sm:$0xff]
      %v1020 = vld [vmem:[#allocation4 + $0x20] sm:$0xff]
      %v1021 = vld [vmem:[#allocation4 + $0x28] sm:$0xff]
      %v1022 = vld [vmem:[#allocation4 + $0x30] sm:$0xff]
      %v1023 = vld [vmem:[#allocation4 + $0x38] sm:$0xff]
      %v1024 = vld [vmem:[#allocation4 + $0x40] sm:$0xff]
      %v1025 = vld [vmem:[#allocation4 + $0x48] sm:$0xff]
      %v1026 = vld [vmem:[#allocation4 + $0x50] sm:$0xff]
      %v1027 = vld [vmem:[#allocation4 + $0x58] sm:$0xff]
      %v1028 = vld [vmem:[#allocation4 + $0x60] sm:$0xff]
      %v1029 = vld [vmem:[#allocation4 + $0x68] sm:$0xff]
      %v1030 = vld [vmem:[#allocation4 + $0x70] sm:$0xff]
      %vm1031 = vcmask 326656
      %v1033 = vsel %vm1031, %v1015, 0
      %1035 = vmatprep.subr.mxu0 0.0
      %1036 = vmatpush1.msra.mxu0 0.0
      %1037 = vmatprep.subr.mxu0 0.0
      %1038 = vmatpush1.msra.mxu0 0.0
      %1039 = vmatprep.subr.mxu0 0.0
      %1040 = vmatpush1.msra.mxu0 0.0
      %1041 = vmatprep.subr.mxu0 0.0
      %1042 = vmatpush1.msra.mxu0 0.0
      %1043 = vmatprep.subr.mxu0 0.0
      %1044 = vmatpush1.msra.mxu0 0.0
      %1045 = vmatprep.subr.mxu0 0.0
      %1046 = vmatpush1.msra.mxu0 0.0
      %1047 = vmatprep.subr.mxu0 0.0
      %1048 = vmatpush1.msra.mxu0 0.0
      %1049 = vmatprep.subr.mxu0 0.0
      %1050 = vmatpush1.msra.mxu0 0.0
      %1051 = vmatprep.subr.mxu0 0.0
      %1052 = vmatpush1.msra.mxu0 0.0
      %1053 = vmatprep.subr.mxu0 0.0
      %1054 = vmatpush1.msra.mxu0 0.0
      %1055 = vmatprep.subr.mxu0 0.0
      %1056 = vmatpush1.msra.mxu0 0.0
      %1057 = vmatprep.subr.mxu0 %v1029
      %1058 = vmatpush1.msra.mxu0 %v1028
      %1059 = vmatprep.subr.mxu0 %v1026
      %1060 = vmatpush1.msra.mxu0 %v1025
      %1061 = vmatprep.subr.mxu0 %v1023
      %1062 = vmatpush1.msra.mxu0 %v1022
      %1063 = vmatprep.subr.mxu0 %v1020
      %1064 = vmatpush1.msra.mxu0 %v1019
      %1065 = vmatprep.subr.mxu0 %v1017
      %1066 = vmatpush1.msra.mxu0 %v1016
      %1067 = vmatprep.subr.mxu0 0.0
      %1068 = vmatpush2.msra.mxu0 0.0
      %1069 = vmatprep.subr.mxu0 0.0
      %1070 = vmatpush2.msra.mxu0 0.0
      %1071 = vmatprep.subr.mxu0 0.0
      %1072 = vmatpush2.msra.mxu0 0.0
      %1073 = vmatprep.subr.mxu0 0.0
      %1074 = vmatpush2.msra.mxu0 0.0
      %1075 = vmatprep.subr.mxu0 0.0
      %1076 = vmatpush2.msra.mxu0 0.0
      %1077 = vmatprep.subr.mxu0 0.0
      %1078 = vmatpush2.msra.mxu0 0.0
      %1079 = vmatprep.subr.mxu0 0.0
      %1080 = vmatpush2.msra.mxu0 0.0
      %1081 = vmatprep.subr.mxu0 0.0
      %1082 = vmatpush2.msra.mxu0 0.0
      %1083 = vmatprep.subr.mxu0 0.0
      %1084 = vmatpush2.msra.mxu0 0.0
      %1085 = vmatprep.subr.mxu0 0.0
      %1086 = vmatpush2.msra.mxu0 0.0
      %1087 = vmatprep.subr.mxu0 0.0
      %1088 = vmatpush2.msra.mxu0 0.0
      %1089 = vmatprep.subr.mxu0 0.0
      %1090 = vmatpush2.msra.mxu0 0.0
      %1091 = vmatprep.subr.mxu0 0.0
      %1092 = vmatpush2.msra.mxu0 0.0
      %1093 = vmatprep.subr.mxu0 0.0
      %1094 = vmatpush2.msra.mxu0 0.0
      %1095 = vmatprep.subr.mxu0 0.0
      %1096 = vmatpush2.msra.mxu0 0.0
      %1097 = vmatprep.subr.mxu0 0.0
      %1098 = vmatpush2.msra.mxu0 0.0
      %1099 = vmatprep.mubr.f32.mxu0 0.0
      %1100 = vmatmul.mubr.f32.gmra.mxu0 %v1033
      %v1101 = vpop.f32.mrf.mxu0
      %v1102 = vadd.f32 0.0, %v1101
      %v1103 = vpop.f32.mrf.mxu0
      %v1104 = vadd.f32 0.0, %v1103
      %1105 = vdwg.mxu0
      %1106 = vmatprep.subr.mxu0 0.0
      %1107 = vmatpush1.msra.mxu0 0.0
      %1108 = vmatprep.subr.mxu0 0.0
      %1109 = vmatpush1.msra.mxu0 0.0
      %1110 = vmatprep.subr.mxu0 0.0
      %1111 = vmatpush1.msra.mxu0 0.0
      %1112 = vmatprep.subr.mxu0 0.0
      %1113 = vmatpush1.msra.mxu0 0.0
      %1114 = vmatprep.subr.mxu0 0.0
      %1115 = vmatpush1.msra.mxu0 0.0
      %1116 = vmatprep.subr.mxu0 0.0
      %1117 = vmatpush1.msra.mxu0 0.0
      %1118 = vmatprep.subr.mxu0 0.0
      %1119 = vmatpush1.msra.mxu0 0.0
      %1120 = vmatprep.subr.mxu0 0.0
      %1121 = vmatpush1.msra.mxu0 0.0
      %1122 = vmatprep.subr.mxu0 0.0
      %1123 = vmatpush1.msra.mxu0 0.0
      %1124 = vmatprep.subr.mxu0 0.0
      %1125 = vmatpush1.msra.mxu0 0.0
      %1126 = vmatprep.subr.mxu0 0.0
      %1127 = vmatpush1.msra.mxu0 0.0
      %1128 = vmatprep.subr.mxu0 0.0
      %1129 = vmatpush1.msra.mxu0 %v1030
      %1130 = vmatprep.subr.mxu0 0.0
      %1131 = vmatpush1.msra.mxu0 %v1027
      %1132 = vmatprep.subr.mxu0 0.0
      %1133 = vmatpush1.msra.mxu0 %v1024
      %1134 = vmatprep.subr.mxu0 0.0
      %1135 = vmatpush1.msra.mxu0 %v1021
      %1136 = vmatprep.subr.mxu0 0.0
      %1137 = vmatpush1.msra.mxu0 %v1018
      %1138 = vmatprep.subr.mxu0 0.0
      %1139 = vmatpush2.msra.mxu0 0.0
      %1140 = vmatprep.subr.mxu0 0.0
      %1141 = vmatpush2.msra.mxu0 0.0
      %1142 = vmatprep.subr.mxu0 0.0
      %1143 = vmatpush2.msra.mxu0 0.0
      %1144 = vmatprep.subr.mxu0 0.0
      %1145 = vmatpush2.msra.mxu0 0.0
      %1146 = vmatprep.subr.mxu0 0.0
      %1147 = vmatpush2.msra.mxu0 0.0
      %1148 = vmatprep.subr.mxu0 0.0
      %1149 = vmatpush2.msra.mxu0 0.0
      %1150 = vmatprep.subr.mxu0 0.0
      %1151 = vmatpush2.msra.mxu0 0.0
      %1152 = vmatprep.subr.mxu0 0.0
      %1153 = vmatpush2.msra.mxu0 0.0
      %1154 = vmatprep.subr.mxu0 0.0
      %1155 = vmatpush2.msra.mxu0 0.0
      %1156 = vmatprep.subr.mxu0 0.0
      %1157 = vmatpush2.msra.mxu0 0.0
      %1158 = vmatprep.subr.mxu0 0.0
      %1159 = vmatpush2.msra.mxu0 0.0
      %1160 = vmatprep.subr.mxu0 0.0
      %1161 = vmatpush2.msra.mxu0 0.0
      %1162 = vmatprep.subr.mxu0 0.0
      %1163 = vmatpush2.msra.mxu0 0.0
      %1164 = vmatprep.subr.mxu0 0.0
      %1165 = vmatpush2.msra.mxu0 0.0
      %1166 = vmatprep.subr.mxu0 0.0
      %1167 = vmatpush2.msra.mxu0 0.0
      %1168 = vmatprep.subr.mxu0 0.0
      %1169 = vmatpush2.msra.mxu0 0.0
      %1170 = vmatprep.mubr.f32.mxu0 0.0
      %1171 = vmatmul.mubr.f32.gmra.mxu0 %v1033
      %v1172 = vpop.f32.mrf.mxu0
      %v1173 = vadd.f32 0.0, %v1172
      %v1174 = vpop.f32.mrf.mxu0
      %1175 = vdwg.mxu0
      %v1176 = vadd.f32 %v644, %v1102
      %v1177 = vadd.f32 %v646, %v1104
      %v1178 = vadd.f32 %v725, %v1173
      %v1179 = vtanh.pop %v1176
      %v1180 = vtanh.pop %v1177
      %v1181 = vtanh.pop %v1178
      %v1182 = vsub.f32 1.0, %v759
      %v1183 = vsub.f32 1.0, %v761
      %v1184 = vsub.f32 1.0, %v763
      %v1185 = vmul.f32 %v1182, %v277
      %v1186 = vmul.f32 %v1183, %v764
      %v1187 = vmul.f32 %v1184, %v278
      %v1188 = vmul.f32 %v759, %v1179
      %v1189 = vmul.f32 %v761, %v1180
      %v1190 = vmul.f32 %v763, %v1181
      %v1191 = vadd.f32 %v1185, %v1188
      %v1192 = vadd.f32 %v1186, %v1189
      %v1193 = vadd.f32 %v1187, %v1190
      %v1194 = vld [vmem:[%s5] sm:$0x7]
      %v1196 = vlaneseq
      %v1197 = vshrl.u32 %v1196, 7
      %v1198 = vsub.s32 0, %v1197
      %v1199 = vrot.slane %v1194, %v1198
      %v1200 = vlaneseq
      %v1201 = vshrl.u32 %v1200, 7
      %v1202 = vsub.s32 1, %v1201
      %v1203 = vrot.slane %v1194, %v1202
      %v1204 = vlaneseq
      %v1205 = vshrl.u32 %v1204, 7
      %v1206 = vsub.s32 2, %v1205
      %v1207 = vrot.slane %v1194, %v1206
      %v1211 = vmul.f32 %v1191, %v1199
      %v1212 = vmul.f32 %v1192, %v1203
      %v1213 = vmul.f32 %v1193, %v1207
      %v1216 = vcombine.low %v1211, %v1212
      %1218 = vst [vmem:[%s271] sm:$0xff] %v1216
      %1219 = vst [vmem:[%s271 + $0x8] sm:$0xf] %v1213
      %p1220 = scmp.lt.s32.totalorder %s17, 1
      %s1221 = scalar_select %p1220, %s17, 1
      %s1222 = smul.addr %s1221, 3
      %s1223 = smul.addr %s1222, 4
      %s1224 = scalar_lea.vmem %s6, %s1223
      // Predicated region
      $region45: #{_lambda_.2} parent=43 // pred_check
        %p1225 = pneg %p171
      $region46: #{_lambda_.2} parent=43 // pred_check_branch
        %1227 = sbr.rel (%p1225) target = $region48
      $region47: #{_lambda_.2} parent=43 // pred_region
        _
      $region48: #{_lambda_.2} parent=43 // pred_fallthru
        _
    $region44: #{_lambda_.2} parent=5 // pred_fallthru
      _
    %p1228 = scmp.le.s32.totalorder 2, %s12
    // Predicated region
    $region49: #{_lambda_.2} parent=5 // pred_check
      %p1229 = pneg %p1228
    $region50: #{_lambda_.2} parent=5 // pred_check_branch
      %1231 = sbr.rel (%p1229) target = $region52
    $region51: #{_lambda_.2} parent=5 // pred_region
      %s1232 = ssub.s32 %s12, 2
      // Predicated region
      $region53: #{_lambda_.2} parent=51 // pred_check
        %p1233 = pneg %p177
      $region54: #{_lambda_.2} parent=51 // pred_check_branch
        %1235 = sbr.rel (%p1233) target = $region56
      $region55: #{_lambda_.2} parent=51 // pred_region
        %p1236 = scmp.lt.s32.totalorder %s18, 1
        %s1237 = scalar_select %p1236, %s18, 1
        %s1238 = smul.addr %s1237, 3
        %s1239 = smul.addr %s1238, 4
        %s1240 = scalar_lea.vmem %s6, %s1239
      $region56: #{_lambda_.2} parent=51 // pred_fallthru
        _
    $region52: #{_lambda_.2} parent=5 // pred_fallthru
      _
  $region6: #{_lambda_.2} parent=0 // loop_footer
    %s16 = sadd.s32 1, %s12
  $region7: #{_lambda_.2} parent=0 // loop_footer_branch
    %11 = sbr.rel target = $region3
  $region8: #{_lambda_.2} parent=0 // loop_exit
    _

</llo_original>
